<compile_context>
chip_gen: v5e
topology: v5e:2x2
jax: 0.10.0
libtpu: 0.0.40
codegen_flags: <defaults>
</compile_context>

<pallas_src>
import functools

import jax
import jax.numpy as jnp
from jax.experimental import pallas as pl
from jax.experimental.pallas import tpu as pltpu


# ---------------------------------------------------------------------------
# Helpers
# ---------------------------------------------------------------------------
def _largest_divisor(n, cap):
    for c in range(min(n, cap), 0, -1):
        if n % c == 0:
            return c
    return 1


# ---------------------------------------------------------------------------
# Pallas kernels
# ---------------------------------------------------------------------------
def _gates_x_kernel(x_ref, w_ref, b_ref, gx_ref):
    """Input projection for both directions: (rt, nIn) @ (nIn, 8H) + (1, 8H)."""
    gx_ref[...] = (
        jnp.dot(x_ref[...], w_ref[...], preferred_element_type=jnp.float32)
        + b_ref[...]
    )


def _lstm_rec_kernel(gx_ref, whh_ref, h_out_ref, h_sc, c_sc, *, hidden, chunk):
    """`chunk` LSTM steps for one direction.

    Grid = (direction, time-chunk).  gx_ref holds the precomputed
    x@W_ih + bias for this direction/chunk (already time-reversed at chunk
    granularity for direction 1 via the index_map); the in-chunk order is
    reversed here for direction 1.  h/c carry in VMEM scratch across chunks.
    """
    d = pl.program_id(0)          # 0 = forward, 1 = backward
    c_id = pl.program_id(1)

    @pl.when(c_id == 0)
    def _():
        h_sc[...] = jnp.zeros_like(h_sc)
        c_sc[...] = jnp.zeros_like(c_sc)

    w_hh = whh_ref[...]           # (H, 4H)
    last = chunk - 1

    def step(s, carry):
        h, c = carry
        # local time index inside the chunk (reversed for the backward pass)
        idx = s * (1 - 2 * d) + d * last
        gates = gx_ref[idx] + jnp.dot(h, w_hh, preferred_element_type=jnp.float32)
        i = jax.nn.sigmoid(gates[:, 0 * hidden:1 * hidden])
        f = jax.nn.sigmoid(gates[:, 1 * hidden:2 * hidden])
        g = jnp.tanh(gates[:, 2 * hidden:3 * hidden])
        o = jax.nn.sigmoid(gates[:, 3 * hidden:4 * hidden])
        c = f * c + i * g
        h = o * jnp.tanh(c)
        h_out_ref[idx] = h
        return (h, c)

    h, c = jax.lax.fori_loop(0, chunk, step, (h_sc[...], c_sc[...]), unroll=True)
    h_sc[...] = h
    c_sc[...] = c


def _linear_kernel(hf_ref, hb_ref, w1_ref, w2_ref, b_ref, o_ref):
    """Embedding on split direction outputs: hf @ W1 + hb @ W2 + b (no concat)."""
    o_ref[...] = (
        jnp.dot(hf_ref[...], w1_ref[...], preferred_element_type=jnp.float32)
        + jnp.dot(hb_ref[...], w2_ref[...], preferred_element_type=jnp.float32)
        + b_ref[...]
    )


# ---------------------------------------------------------------------------
# Wrapper
# ---------------------------------------------------------------------------
def bidirectional_lstm(x, params, *, chunk=None, row_tile=512):
    """Forward pass of BidirectionalLSTM.  x: (T, B, nIn) -> (T, B, nOut)."""
    T, B, nIn = x.shape
    H = params["w_hh"].shape[1]
    nOut = params["w_emb"].shape[1]

    rows = T * B
    rt = _largest_divisor(rows, row_tile)

    # ---- Phase 1: x @ [W_ih_f | W_ih_b] + bias for all T*B rows at once -----
    x_flat = x.reshape(rows, nIn)
    w_cat = jnp.concatenate([params["w_ih"][0], params["w_ih"][1]], axis=-1)  # (nIn, 8H)
    b_cat = jnp.concatenate([params["bias"][0], params["bias"][1]], axis=-1)  # (1, 8H)

    gx_flat = pl.pallas_call(
        _gates_x_kernel,
        out_shape=jax.ShapeDtypeStruct((rows, 8 * H), jnp.float32),
        grid=(rows // rt,),
        in_specs=[
            pl.BlockSpec((rt, nIn), lambda r: (r, 0)),
            pl.BlockSpec((nIn, 8 * H), lambda r: (0, 0)),
            pl.BlockSpec((1, 8 * H), lambda r: (0, 0)),
        ],
        out_specs=pl.BlockSpec((rt, 8 * H), lambda r: (r, 0)),
        compiler_params=pltpu.CompilerParams(dimension_semantics=("parallel",)),
    )(x_flat, w_cat, b_cat)

    gx = gx_flat.reshape(T, B, 8 * H)     # contiguous reshape: free

    # ---- Phase 2: recurrence (only h @ W_hh per step) ------------------------
    if chunk is None:
        chunk = _largest_divisor(T, 16)
    nc = T // chunk

    def gx_map(d, c):
        # chunk-granularity time reversal for the backward direction; the last
        # dim block index d selects this direction's 4H gate columns.
        return (c * (1 - 2 * d) + d * (nc - 1), 0, d)

    def out_map(d, c):
        return (d, c * (1 - 2 * d) + d * (nc - 1), 0, 0)

    h_out = pl.pallas_call(
        functools.partial(_lstm_rec_kernel, hidden=H, chunk=chunk),
        out_shape=jax.ShapeDtypeStruct((2, T, B, H), jnp.float32),
        grid_spec=pltpu.PrefetchScalarGridSpec(
            num_scalar_prefetch=0,
            grid=(2, nc),
            in_specs=[
                pl.BlockSpec((chunk, B, 4 * H), gx_map),
                pl.BlockSpec((None, H, 4 * H), lambda d, c: (d, 0, 0)),
            ],
            out_specs=pl.BlockSpec((None, chunk, B, H), out_map),
            scratch_shapes=[
                pltpu.VMEM((B, H), jnp.float32),   # h carry
                pltpu.VMEM((B, H), jnp.float32),   # c carry
            ],
        ),
        compiler_params=pltpu.CompilerParams(
            dimension_semantics=("parallel", "arbitrary")
        ),
    )(gx, params["w_hh"])

    # ---- Phase 3: embedding on split direction outputs (no concat) ----------
    h_flat = h_out.reshape(2, rows, H)    # contiguous reshape: free
    w1 = params["w_emb"][:H]              # forward half of (2H, nOut)
    w2 = params["w_emb"][H:]              # backward half

    out = pl.pallas_call(
        _linear_kernel,
        out_shape=jax.ShapeDtypeStruct((rows, nOut), jnp.float32),
        grid=(rows // rt,),
        in_specs=[
            pl.BlockSpec((None, rt, H), lambda r: (0, r, 0)),   # forward rows
            pl.BlockSpec((None, rt, H), lambda r: (1, r, 0)),   # backward rows
            pl.BlockSpec((H, nOut), lambda r: (0, 0)),
            pl.BlockSpec((H, nOut), lambda r: (0, 0)),
            pl.BlockSpec((1, nOut), lambda r: (0, 0)),
        ],
        out_specs=pl.BlockSpec((rt, nOut), lambda r: (r, 0)),
        compiler_params=pltpu.CompilerParams(dimension_semantics=("parallel",)),
    )(h_flat, h_flat, w1, w2, params["b_emb"])

    # TODO(synk): for production sizes, cast weights/activations to bfloat16
    # (f32 accumulation) and pad nOut/H to multiples of 128 for lane-dense tiles.
    return out.reshape(T, B, nOut)


# ---------------------------------------------------------------------------
# Deterministic parameter init (PyTorch-style uniform(-1/sqrt(H), 1/sqrt(H)))
# ---------------------------------------------------------------------------
def init_params(key, n_in, n_hidden, n_out):
    ks = jax.random.split(key, 6)
    s = 1.0 / jnp.sqrt(jnp.float32(n_hidden))
    w_ih = jax.random.uniform(ks[0], (2, n_in, 4 * n_hidden), jnp.float32, -s, s)
    w_hh = jax.random.uniform(ks[1], (2, n_hidden, 4 * n_hidden), jnp.float32, -s, s)
    b_ih = jax.random.uniform(ks[2], (2, 1, 4 * n_hidden), jnp.float32, -s, s)
    b_hh = jax.random.uniform(ks[3], (2, 1, 4 * n_hidden), jnp.float32, -s, s)
    se = 1.0 / jnp.sqrt(jnp.float32(2 * n_hidden))
    w_emb = jax.random.uniform(ks[4], (2 * n_hidden, n_out), jnp.float32, -se, se)
    b_emb = jax.random.uniform(ks[5], (1, n_out), jnp.float32, -se, se)
    return dict(w_ih=w_ih, w_hh=w_hh, bias=b_ih + b_hh, w_emb=w_emb, b_emb=b_emb)


# ---------------------------------------------------------------------------
# Pure-JAX reference (for correctness check)
# ---------------------------------------------------------------------------
def _lstm_ref_dir(x, w_ih, w_hh, bias, hidden):
    def step(carry, xt):
        h, c = carry
        gates = xt @ w_ih + h @ w_hh + bias
        i = jax.nn.sigmoid(gates[:, :hidden])
        f = jax.nn.sigmoid(gates[:, hidden:2 * hidden])
        g = jnp.tanh(gates[:, 2 * hidden:3 * hidden])
        o = jax.nn.sigmoid(gates[:, 3 * hidden:])
        c = f * c + i * g
        h = o * jnp.tanh(c)
        return (h, c), h

    B = x.shape[1]
    init = (jnp.zeros((B, hidden), jnp.float32), jnp.zeros((B, hidden), jnp.float32))
    _, hs = jax.lax.scan(step, init, x)
    return hs


def ref_forward(x, params):
    H = params["w_hh"].shape[1]
    h_f = _lstm_ref_dir(x, params["w_ih"][0], params["w_hh"][0], params["bias"][0], H)
    h_b = _lstm_ref_dir(
        x[::-1], params["w_ih"][1], params["w_hh"][1], params["bias"][1], H
    )[::-1]
    rec = jnp.concatenate([h_f, h_b], axis=-1)
    T, B, _ = rec.shape
    out = rec.reshape(T * B, -1) @ params["w_emb"] + params["b_emb"]
    return out.reshape(T, B, -1)


# ---------------------------------------------------------------------------
if __name__ == "__main__":
    T, B, nIn, nHidden, nOut = 8, 2, 32, 32, 16

    key = jax.random.PRNGKey(0)
    k_x, k_p = jax.random.split(key)
    x = jax.random.normal(k_x, (T, B, nIn), jnp.float32)
    params = init_params(k_p, nIn, nHidden, nOut)

    fwd = jax.jit(bidirectional_lstm)
    out = jax.block_until_ready(fwd(x, params))
    ref = jax.block_until_ready(ref_forward(x, params))

    assert out.shape == (T, B, nOut), out.shape
    assert jnp.allclose(out, ref, rtol=1e-4, atol=1e-4), (
        float(jnp.max(jnp.abs(out - ref)))
    )
    print("KERNEL_OK")
</pallas_src>

<mosaic_0001>
module attributes {stable_mosaic.version = 11 : i64} {
  func.func @_gates_x_kernel(%arg0: i32, %arg1: memref<16x32xf32, #tpu.memory_space<vmem>>, %arg2: memref<32x256xf32, #tpu.memory_space<vmem>>, %arg3: memref<1x256xf32, #tpu.memory_space<vmem>>, %arg4: memref<16x256xf32, #tpu.memory_space<vmem>>) attributes {dimension_semantics = [#tpu.dimension_semantics<parallel>], iteration_bounds = array<i64: 1>, scalar_prefetch = 0 : i64, scratch_operands = 0 : i64, tpu.core_type = #tpu.core_type<tc>, window_params = [{transform_indices = @transform_0, window_bounds = array<i64: 16, 32>}, {pipeline_mode = #tpu.pipeline_mode<synchronous>, transform_indices = @transform_1, window_bounds = array<i64: 32, 256>}, {pipeline_mode = #tpu.pipeline_mode<synchronous>, transform_indices = @transform_2, window_bounds = array<i64: 1, 256>}, {transform_indices = @transform_3, window_bounds = array<i64: 16, 256>}]} {
    %c0 = arith.constant 0 : index
    %c0_0 = arith.constant 0 : index
    %0 = vector.load %arg1[%c0, %c0_0] : memref<16x32xf32, #tpu.memory_space<vmem>>, vector<16x32xf32>
    %c0_1 = arith.constant 0 : index
    %c0_2 = arith.constant 0 : index
    %1 = vector.load %arg2[%c0_1, %c0_2] : memref<32x256xf32, #tpu.memory_space<vmem>>, vector<32x256xf32>
    %cst = arith.constant dense<0.000000e+00> : vector<16x256xf32>
    %2 = tpu.matmul %0, %1, %cst {dimension_numbers = #tpu.dot_dimension_numbers<[1], [0], [0], [1], [0, 0, 1, 1], [], []>} : vector<16x32xf32>, vector<32x256xf32>, vector<16x256xf32> -> vector<16x256xf32>
    %c0_3 = arith.constant 0 : index
    %c0_4 = arith.constant 0 : index
    %3 = vector.load %arg3[%c0_3, %c0_4] : memref<1x256xf32, #tpu.memory_space<vmem>>, vector<1x256xf32>
    %4 = vector.broadcast %3 : vector<1x256xf32> to vector<16x256xf32>
    %5 = arith.addf %2, %4 : vector<16x256xf32>
    %c0_5 = arith.constant 0 : index
    %c0_6 = arith.constant 0 : index
    %6 = vector.load %arg4[%c0_5, %c0_6] : memref<16x256xf32, #tpu.memory_space<vmem>>, vector<16x256xf32>
    tpu.vector_store %arg4[%c0_5, %c0_6], %5 {strides = array<i32>} : memref<16x256xf32, #tpu.memory_space<vmem>>, vector<16x256xf32>,
    return
  }
  func.func @transform_0(%arg0: i32) -> (i32, i32) {
    %c0_i32 = arith.constant 0 : i32
    %c0_i32_0 = arith.constant 0 : i32
    return %arg0, %c0_i32 : i32, i32
  }
  func.func @transform_1(%arg0: i32) -> (i32, i32) {
    %c0_i32 = arith.constant 0 : i32
    %c0_i32_0 = arith.constant 0 : i32
    %c0_i32_1 = arith.constant 0 : i32
    return %c0_i32, %c0_i32_0 : i32, i32
  }
  func.func @transform_2(%arg0: i32) -> (i32, i32) {
    %c0_i32 = arith.constant 0 : i32
    %c0_i32_0 = arith.constant 0 : i32
    %c0_i32_1 = arith.constant 0 : i32
    return %c0_i32, %c0_i32_0 : i32, i32
  }
  func.func @transform_3(%arg0: i32) -> (i32, i32) {
    %c0_i32 = arith.constant 0 : i32
    %c0_i32_0 = arith.constant 0 : i32
    return %arg0, %c0_i32 : i32, i32
  }
}

module attributes {stable_mosaic.version = 11 : i64} {
  func.func @_lstm_rec_kernel(%arg0: i32, %arg1: i32, %arg2: memref<8x2x128xf32, #tpu.memory_space<vmem>>, %arg3: memref<1x32x128xf32, #tpu.memory_space<vmem>>, %arg4: memref<1x8x2x32xf32, #tpu.memory_space<vmem>>, %arg5: memref<2x32xf32, #tpu.memory_space<vmem>>, %arg6: memref<2x32xf32, #tpu.memory_space<vmem>>) attributes {dimension_semantics = [#tpu.dimension_semantics<parallel>, #tpu.dimension_semantics<arbitrary>], iteration_bounds = array<i64: 2, 1>, scalar_prefetch = 0 : i64, scratch_operands = 2 : i64, tpu.core_type = #tpu.core_type<tc>, window_params = [{transform_indices = @transform_0, window_bounds = array<i64: 8, 2, 128>}, {transform_indices = @transform_1, window_bounds = array<i64: 1, 32, 128>}, {transform_indices = @transform_2, window_bounds = array<i64: 1, 8, 2, 32>}]} {
    %c0_i32 = arith.constant 0 : i32
    %0 = arith.cmpi eq, %arg1, %c0_i32 : i32
    %1 = arith.extui %0 : i1 to i32
    %c0_i32_0 = arith.constant 0 : i32
    %2 = arith.cmpi ne, %1, %c0_i32_0 : i32
    scf.if %2 {
      %cst_107 = arith.constant 0.000000e+00 : f32
      %321 = vector.broadcast %cst_107 : f32 to vector<2x32xf32>
      %c0_108 = arith.constant 0 : index
      %c0_109 = arith.constant 0 : index
      %322 = vector.load %arg5[%c0_108, %c0_109] : memref<2x32xf32, #tpu.memory_space<vmem>>, vector<2x32xf32>
      tpu.vector_store %arg5[%c0_108, %c0_109], %321 {strides = array<i32>} : memref<2x32xf32, #tpu.memory_space<vmem>>, vector<2x32xf32>,
      %cst_110 = arith.constant 0.000000e+00 : f32
      %323 = vector.broadcast %cst_110 : f32 to vector<2x32xf32>
      %c0_111 = arith.constant 0 : index
      %c0_112 = arith.constant 0 : index
      %324 = vector.load %arg6[%c0_111, %c0_112] : memref<2x32xf32, #tpu.memory_space<vmem>>, vector<2x32xf32>
      tpu.vector_store %arg6[%c0_111, %c0_112], %323 {strides = array<i32>} : memref<2x32xf32, #tpu.memory_space<vmem>>, vector<2x32xf32>,
    } else {
    }
    %c0 = arith.constant 0 : index
    %c0_1 = arith.constant 0 : index
    %c0_2 = arith.constant 0 : index
    %3 = vector.load %arg3[%c0, %c0_1, %c0_2] : memref<1x32x128xf32, #tpu.memory_space<vmem>>, vector<1x32x128xf32>
    %4 = vector.shape_cast %3 : vector<1x32x128xf32> to vector<32x128xf32>
    %c0_3 = arith.constant 0 : index
    %c0_4 = arith.constant 0 : index
    %5 = vector.load %arg5[%c0_3, %c0_4] : memref<2x32xf32, #tpu.memory_space<vmem>>, vector<2x32xf32>
    %c0_5 = arith.constant 0 : index
    %c0_6 = arith.constant 0 : index
    %6 = vector.load %arg6[%c0_5, %c0_6] : memref<2x32xf32, #tpu.memory_space<vmem>>, vector<2x32xf32>
    %c0_i32_7 = arith.constant 0 : i32
    %c2_i32 = arith.constant 2 : i32
    %7 = arith.muli %c2_i32, %arg0 : i32
    %c1_i32 = arith.constant 1 : i32
    %8 = arith.subi %c1_i32, %7 : i32
    %9 = arith.muli %c0_i32_7, %8 : i32
    %c7_i32 = arith.constant 7 : i32
    %10 = arith.muli %arg0, %c7_i32 : i32
    %11 = arith.addi %9, %10 : i32
    %12 = arith.index_cast %11 : i32 to index
    %c0_8 = arith.constant 0 : index
    %c0_9 = arith.constant 0 : index
    %13 = vector.load %arg2[%12, %c0_8, %c0_9] : memref<8x2x128xf32, #tpu.memory_space<vmem>>, vector<1x2x128xf32>
    %14 = vector.shape_cast %13 : vector<1x2x128xf32> to vector<2x128xf32>
    %cst = arith.constant dense<0.000000e+00> : vector<2x128xf32>
    %15 = tpu.matmul %5, %4, %cst {dimension_numbers = #tpu.dot_dimension_numbers<[1], [0], [0], [1], [0, 0, 1, 1], [], []>} : vector<2x32xf32>, vector<32x128xf32>, vector<2x128xf32> -> vector<2x128xf32>
    %16 = arith.addf %14, %15 : vector<2x128xf32>
    %17 = vector.extract_strided_slice %16 {offsets = [0, 0], sizes = [2, 32], strides = [1, 1]} : vector<2x128xf32> to vector<2x32xf32>
    %18 = arith.negf %17 : vector<2x32xf32>
    %19 = math.exp %18 : vector<2x32xf32>
    %cst_10 = arith.constant 1.000000e+00 : f32
    %20 = vector.broadcast %cst_10 : f32 to vector<2x32xf32>
    %21 = arith.addf %20, %19 : vector<2x32xf32>
    %22 = arith.divf %20, %21 : vector<2x32xf32>
    %23 = vector.extract_strided_slice %16 {offsets = [0, 32], sizes = [2, 32], strides = [1, 1]} : vector<2x128xf32> to vector<2x32xf32>
    %24 = arith.negf %23 : vector<2x32xf32>
    %25 = math.exp %24 : vector<2x32xf32>
    %cst_11 = arith.constant 1.000000e+00 : f32
    %26 = vector.broadcast %cst_11 : f32 to vector<2x32xf32>
    %27 = arith.addf %26, %25 : vector<2x32xf32>
    %28 = arith.divf %26, %27 : vector<2x32xf32>
    %29 = vector.extract_strided_slice %16 {offsets = [0, 64], sizes = [2, 32], strides = [1, 1]} : vector<2x128xf32> to vector<2x32xf32>
    %30 = math.tanh %29 : vector<2x32xf32>
    %31 = vector.extract_strided_slice %16 {offsets = [0, 96], sizes = [2, 32], strides = [1, 1]} : vector<2x128xf32> to vector<2x32xf32>
    %32 = arith.negf %31 : vector<2x32xf32>
    %33 = math.exp %32 : vector<2x32xf32>
    %cst_12 = arith.constant 1.000000e+00 : f32
    %34 = vector.broadcast %cst_12 : f32 to vector<2x32xf32>
    %35 = arith.addf %34, %33 : vector<2x32xf32>
    %36 = arith.divf %34, %35 : vector<2x32xf32>
    %37 = arith.mulf %28, %6 : vector<2x32xf32>
    %38 = arith.mulf %22, %30 : vector<2x32xf32>
    %39 = arith.addf %37, %38 : vector<2x32xf32>
    %40 = math.tanh %39 : vector<2x32xf32>
    %41 = arith.mulf %36, %40 : vector<2x32xf32>
    %c0_13 = arith.constant 0 : index
    %42 = arith.index_cast %11 : i32 to index
    %c0_14 = arith.constant 0 : index
    %c0_15 = arith.constant 0 : index
    %43 = vector.load %arg4[%c0_13, %42, %c0_14, %c0_15] : memref<1x8x2x32xf32, #tpu.memory_space<vmem>>, vector<1x1x2x32xf32>
    %44 = vector.shape_cast %43 : vector<1x1x2x32xf32> to vector<2x32xf32>
    %45 = vector.shape_cast %41 : vector<2x32xf32> to vector<1x1x2x32xf32>
    tpu.vector_store %arg4[%c0_13, %42, %c0_14, %c0_15], %45 {strides = array<i32>} : memref<1x8x2x32xf32, #tpu.memory_space<vmem>>, vector<1x1x2x32xf32>,
    %c1_i32_16 = arith.constant 1 : i32
    %c2_i32_17 = arith.constant 2 : i32
    %46 = arith.muli %c2_i32_17, %arg0 : i32
    %c1_i32_18 = arith.constant 1 : i32
    %47 = arith.subi %c1_i32_18, %46 : i32
    %48 = arith.muli %c1_i32_16, %47 : i32
    %c7_i32_19 = arith.constant 7 : i32
    %49 = arith.muli %arg0, %c7_i32_19 : i32
    %50 = arith.addi %48, %49 : i32
    %51 = arith.index_cast %50 : i32 to index
    %c0_20 = arith.constant 0 : index
    %c0_21 = arith.constant 0 : index
    %52 = vector.load %arg2[%51, %c0_20, %c0_21] : memref<8x2x128xf32, #tpu.memory_space<vmem>>, vector<1x2x128xf32>
    %53 = vector.shape_cast %52 : vector<1x2x128xf32> to vector<2x128xf32>
    %cst_22 = arith.constant dense<0.000000e+00> : vector<2x128xf32>
    %54 = tpu.matmul %41, %4, %cst_22 {dimension_numbers = #tpu.dot_dimension_numbers<[1], [0], [0], [1], [0, 0, 1, 1], [], []>} : vector<2x32xf32>, vector<32x128xf32>, vector<2x128xf32> -> vector<2x128xf32>
    %55 = arith.addf %53, %54 : vector<2x128xf32>
    %56 = vector.extract_strided_slice %55 {offsets = [0, 0], sizes = [2, 32], strides = [1, 1]} : vector<2x128xf32> to vector<2x32xf32>
    %57 = arith.negf %56 : vector<2x32xf32>
    %58 = math.exp %57 : vector<2x32xf32>
    %cst_23 = arith.constant 1.000000e+00 : f32
    %59 = vector.broadcast %cst_23 : f32 to vector<2x32xf32>
    %60 = arith.addf %59, %58 : vector<2x32xf32>
    %61 = arith.divf %59, %60 : vector<2x32xf32>
    %62 = vector.extract_strided_slice %55 {offsets = [0, 32], sizes = [2, 32], strides = [1, 1]} : vector<2x128xf32> to vector<2x32xf32>
    %63 = arith.negf %62 : vector<2x32xf32>
    %64 = math.exp %63 : vector<2x32xf32>
    %cst_24 = arith.constant 1.000000e+00 : f32
    %65 = vector.broadcast %cst_24 : f32 to vector<2x32xf32>
    %66 = arith.addf %65, %64 : vector<2x32xf32>
    %67 = arith.divf %65, %66 : vector<2x32xf32>
    %68 = vector.extract_strided_slice %55 {offsets = [0, 64], sizes = [2, 32], strides = [1, 1]} : vector<2x128xf32> to vector<2x32xf32>
    %69 = math.tanh %68 : vector<2x32xf32>
    %70 = vector.extract_strided_slice %55 {offsets = [0, 96], sizes = [2, 32], strides = [1, 1]} : vector<2x128xf32> to vector<2x32xf32>
    %71 = arith.negf %70 : vector<2x32xf32>
    %72 = math.exp %71 : vector<2x32xf32>
    %cst_25 = arith.constant 1.000000e+00 : f32
    %73 = vector.broadcast %cst_25 : f32 to vector<2x32xf32>
    %74 = arith.addf %73, %72 : vector<2x32xf32>
    %75 = arith.divf %73, %74 : vector<2x32xf32>
    %76 = arith.mulf %67, %39 : vector<2x32xf32>
    %77 = arith.mulf %61, %69 : vector<2x32xf32>
    %78 = arith.addf %76, %77 : vector<2x32xf32>
    %79 = math.tanh %78 : vector<2x32xf32>
    %80 = arith.mulf %75, %79 : vector<2x32xf32>
    %c0_26 = arith.constant 0 : index
    %81 = arith.index_cast %50 : i32 to index
    %c0_27 = arith.constant 0 : index
    %c0_28 = arith.constant 0 : index
    %82 = vector.load %arg4[%c0_26, %81, %c0_27, %c0_28] : memref<1x8x2x32xf32, #tpu.memory_space<vmem>>, vector<1x1x2x32xf32>
    %83 = vector.shape_cast %82 : vector<1x1x2x32xf32> to vector<2x32xf32>
    %84 = vector.shape_cast %80 : vector<2x32xf32> to vector<1x1x2x32xf32>
    tpu.vector_store %arg4[%c0_26, %81, %c0_27, %c0_28], %84 {strides = array<i32>} : memref<1x8x2x32xf32, #tpu.memory_space<vmem>>, vector<1x1x2x32xf32>,
    %c2_i32_29 = arith.constant 2 : i32
    %c2_i32_30 = arith.constant 2 : i32
    %85 = arith.muli %c2_i32_30, %arg0 : i32
    %c1_i32_31 = arith.constant 1 : i32
    %86 = arith.subi %c1_i32_31, %85 : i32
    %87 = arith.muli %c2_i32_29, %86 : i32
    %c7_i32_32 = arith.constant 7 : i32
    %88 = arith.muli %arg0, %c7_i32_32 : i32
    %89 = arith.addi %87, %88 : i32
    %90 = arith.index_cast %89 : i32 to index
    %c0_33 = arith.constant 0 : index
    %c0_34 = arith.constant 0 : index
    %91 = vector.load %arg2[%90, %c0_33, %c0_34] : memref<8x2x128xf32, #tpu.memory_space<vmem>>, vector<1x2x128xf32>
    %92 = vector.shape_cast %91 : vector<1x2x128xf32> to vector<2x128xf32>
    %cst_35 = arith.constant dense<0.000000e+00> : vector<2x128xf32>
    %93 = tpu.matmul %80, %4, %cst_35 {dimension_numbers = #tpu.dot_dimension_numbers<[1], [0], [0], [1], [0, 0, 1, 1], [], []>} : vector<2x32xf32>, vector<32x128xf32>, vector<2x128xf32> -> vector<2x128xf32>
    %94 = arith.addf %92, %93 : vector<2x128xf32>
    %95 = vector.extract_strided_slice %94 {offsets = [0, 0], sizes = [2, 32], strides = [1, 1]} : vector<2x128xf32> to vector<2x32xf32>
    %96 = arith.negf %95 : vector<2x32xf32>
    %97 = math.exp %96 : vector<2x32xf32>
    %cst_36 = arith.constant 1.000000e+00 : f32
    %98 = vector.broadcast %cst_36 : f32 to vector<2x32xf32>
    %99 = arith.addf %98, %97 : vector<2x32xf32>
    %100 = arith.divf %98, %99 : vector<2x32xf32>
    %101 = vector.extract_strided_slice %94 {offsets = [0, 32], sizes = [2, 32], strides = [1, 1]} : vector<2x128xf32> to vector<2x32xf32>
    %102 = arith.negf %101 : vector<2x32xf32>
    %103 = math.exp %102 : vector<2x32xf32>
    %cst_37 = arith.constant 1.000000e+00 : f32
    %104 = vector.broadcast %cst_37 : f32 to vector<2x32xf32>
    %105 = arith.addf %104, %103 : vector<2x32xf32>
    %106 = arith.divf %104, %105 : vector<2x32xf32>
    %107 = vector.extract_strided_slice %94 {offsets = [0, 64], sizes = [2, 32], strides = [1, 1]} : vector<2x128xf32> to vector<2x32xf32>
    %108 = math.tanh %107 : vector<2x32xf32>
    %109 = vector.extract_strided_slice %94 {offsets = [0, 96], sizes = [2, 32], strides = [1, 1]} : vector<2x128xf32> to vector<2x32xf32>
    %110 = arith.negf %109 : vector<2x32xf32>
    %111 = math.exp %110 : vector<2x32xf32>
    %cst_38 = arith.constant 1.000000e+00 : f32
    %112 = vector.broadcast %cst_38 : f32 to vector<2x32xf32>
    %113 = arith.addf %112, %111 : vector<2x32xf32>
    %114 = arith.divf %112, %113 : vector<2x32xf32>
    %115 = arith.mulf %106, %78 : vector<2x32xf32>
    %116 = arith.mulf %100, %108 : vector<2x32xf32>
    %117 = arith.addf %115, %116 : vector<2x32xf32>
    %118 = math.tanh %117 : vector<2x32xf32>
    %119 = arith.mulf %114, %118 : vector<2x32xf32>
    %c0_39 = arith.constant 0 : index
    %120 = arith.index_cast %89 : i32 to index
    %c0_40 = arith.constant 0 : index
    %c0_41 = arith.constant 0 : index
    %121 = vector.load %arg4[%c0_39, %120, %c0_40, %c0_41] : memref<1x8x2x32xf32, #tpu.memory_space<vmem>>, vector<1x1x2x32xf32>
    %122 = vector.shape_cast %121 : vector<1x1x2x32xf32> to vector<2x32xf32>
    %123 = vector.shape_cast %119 : vector<2x32xf32> to vector<1x1x2x32xf32>
    tpu.vector_store %arg4[%c0_39, %120, %c0_40, %c0_41], %123 {strides = array<i32>} : memref<1x8x2x32xf32, #tpu.memory_space<vmem>>, vector<1x1x2x32xf32>,
    %c3_i32 = arith.constant 3 : i32
    %c2_i32_42 = arith.constant 2 : i32
    %124 = arith.muli %c2_i32_42, %arg0 : i32
    %c1_i32_43 = arith.constant 1 : i32
    %125 = arith.subi %c1_i32_43, %124 : i32
    %126 = arith.muli %c3_i32, %125 : i32
    %c7_i32_44 = arith.constant 7 : i32
    %127 = arith.muli %arg0, %c7_i32_44 : i32
    %128 = arith.addi %126, %127 : i32
    %129 = arith.index_cast %128 : i32 to index
    %c0_45 = arith.constant 0 : index
    %c0_46 = arith.constant 0 : index
    %130 = vector.load %arg2[%129, %c0_45, %c0_46] : memref<8x2x128xf32, #tpu.memory_space<vmem>>, vector<1x2x128xf32>
    %131 = vector.shape_cast %130 : vector<1x2x128xf32> to vector<2x128xf32>
    %cst_47 = arith.constant dense<0.000000e+00> : vector<2x128xf32>
    %132 = tpu.matmul %119, %4, %cst_47 {dimension_numbers = #tpu.dot_dimension_numbers<[1], [0], [0], [1], [0, 0, 1, 1], [], []>} : vector<2x32xf32>, vector<32x128xf32>, vector<2x128xf32> -> vector<2x128xf32>
    %133 = arith.addf %131, %132 : vector<2x128xf32>
    %134 = vector.extract_strided_slice %133 {offsets = [0, 0], sizes = [2, 32], strides = [1, 1]} : vector<2x128xf32> to vector<2x32xf32>
    %135 = arith.negf %134 : vector<2x32xf32>
    %136 = math.exp %135 : vector<2x32xf32>
    %cst_48 = arith.constant 1.000000e+00 : f32
    %137 = vector.broadcast %cst_48 : f32 to vector<2x32xf32>
    %138 = arith.addf %137, %136 : vector<2x32xf32>
    %139 = arith.divf %137, %138 : vector<2x32xf32>
    %140 = vector.extract_strided_slice %133 {offsets = [0, 32], sizes = [2, 32], strides = [1, 1]} : vector<2x128xf32> to vector<2x32xf32>
    %141 = arith.negf %140 : vector<2x32xf32>
    %142 = math.exp %141 : vector<2x32xf32>
    %cst_49 = arith.constant 1.000000e+00 : f32
    %143 = vector.broadcast %cst_49 : f32 to vector<2x32xf32>
    %144 = arith.addf %143, %142 : vector<2x32xf32>
    %145 = arith.divf %143, %144 : vector<2x32xf32>
    %146 = vector.extract_strided_slice %133 {offsets = [0, 64], sizes = [2, 32], strides = [1, 1]} : vector<2x128xf32> to vector<2x32xf32>
    %147 = math.tanh %146 : vector<2x32xf32>
    %148 = vector.extract_strided_slice %133 {offsets = [0, 96], sizes = [2, 32], strides = [1, 1]} : vector<2x128xf32> to vector<2x32xf32>
    %149 = arith.negf %148 : vector<2x32xf32>
    %150 = math.exp %149 : vector<2x32xf32>
    %cst_50 = arith.constant 1.000000e+00 : f32
    %151 = vector.broadcast %cst_50 : f32 to vector<2x32xf32>
    %152 = arith.addf %151, %150 : vector<2x32xf32>
    %153 = arith.divf %151, %152 : vector<2x32xf32>
    %154 = arith.mulf %145, %117 : vector<2x32xf32>
    %155 = arith.mulf %139, %147 : vector<2x32xf32>
    %156 = arith.addf %154, %155 : vector<2x32xf32>
    %157 = math.tanh %156 : vector<2x32xf32>
    %158 = arith.mulf %153, %157 : vector<2x32xf32>
    %c0_51 = arith.constant 0 : index
    %159 = arith.index_cast %128 : i32 to index
    %c0_52 = arith.constant 0 : index
    %c0_53 = arith.constant 0 : index
    %160 = vector.load %arg4[%c0_51, %159, %c0_52, %c0_53] : memref<1x8x2x32xf32, #tpu.memory_space<vmem>>, vector<1x1x2x32xf32>
    %161 = vector.shape_cast %160 : vector<1x1x2x32xf32> to vector<2x32xf32>
    %162 = vector.shape_cast %158 : vector<2x32xf32> to vector<1x1x2x32xf32>
    tpu.vector_store %arg4[%c0_51, %159, %c0_52, %c0_53], %162 {strides = array<i32>} : memref<1x8x2x32xf32, #tpu.memory_space<vmem>>, vector<1x1x2x32xf32>,
    %c4_i32 = arith.constant 4 : i32
    %c2_i32_54 = arith.constant 2 : i32
    %163 = arith.muli %c2_i32_54, %arg0 : i32
    %c1_i32_55 = arith.constant 1 : i32
    %164 = arith.subi %c1_i32_55, %163 : i32
    %165 = arith.muli %c4_i32, %164 : i32
    %c7_i32_56 = arith.constant 7 : i32
    %166 = arith.muli %arg0, %c7_i32_56 : i32
    %167 = arith.addi %165, %166 : i32
    %168 = arith.index_cast %167 : i32 to index
    %c0_57 = arith.constant 0 : index
    %c0_58 = arith.constant 0 : index
    %169 = vector.load %arg2[%168, %c0_57, %c0_58] : memref<8x2x128xf32, #tpu.memory_space<vmem>>, vector<1x2x128xf32>
    %170 = vector.shape_cast %169 : vector<1x2x128xf32> to vector<2x128xf32>
    %cst_59 = arith.constant dense<0.000000e+00> : vector<2x128xf32>
    %171 = tpu.matmul %158, %4, %cst_59 {dimension_numbers = #tpu.dot_dimension_numbers<[1], [0], [0], [1], [0, 0, 1, 1], [], []>} : vector<2x32xf32>, vector<32x128xf32>, vector<2x128xf32> -> vector<2x128xf32>
    %172 = arith.addf %170, %171 : vector<2x128xf32>
    %173 = vector.extract_strided_slice %172 {offsets = [0, 0], sizes = [2, 32], strides = [1, 1]} : vector<2x128xf32> to vector<2x32xf32>
    %174 = arith.negf %173 : vector<2x32xf32>
    %175 = math.exp %174 : vector<2x32xf32>
    %cst_60 = arith.constant 1.000000e+00 : f32
    %176 = vector.broadcast %cst_60 : f32 to vector<2x32xf32>
    %177 = arith.addf %176, %175 : vector<2x32xf32>
    %178 = arith.divf %176, %177 : vector<2x32xf32>
    %179 = vector.extract_strided_slice %172 {offsets = [0, 32], sizes = [2, 32], strides = [1, 1]} : vector<2x128xf32> to vector<2x32xf32>
    %180 = arith.negf %179 : vector<2x32xf32>
    %181 = math.exp %180 : vector<2x32xf32>
    %cst_61 = arith.constant 1.000000e+00 : f32
    %182 = vector.broadcast %cst_61 : f32 to vector<2x32xf32>
    %183 = arith.addf %182, %181 : vector<2x32xf32>
    %184 = arith.divf %182, %183 : vector<2x32xf32>
    %185 = vector.extract_strided_slice %172 {offsets = [0, 64], sizes = [2, 32], strides = [1, 1]} : vector<2x128xf32> to vector<2x32xf32>
    %186 = math.tanh %185 : vector<2x32xf32>
    %187 = vector.extract_strided_slice %172 {offsets = [0, 96], sizes = [2, 32], strides = [1, 1]} : vector<2x128xf32> to vector<2x32xf32>
    %188 = arith.negf %187 : vector<2x32xf32>
    %189 = math.exp %188 : vector<2x32xf32>
    %cst_62 = arith.constant 1.000000e+00 : f32
    %190 = vector.broadcast %cst_62 : f32 to vector<2x32xf32>
    %191 = arith.addf %190, %189 : vector<2x32xf32>
    %192 = arith.divf %190, %191 : vector<2x32xf32>
    %193 = arith.mulf %184, %156 : vector<2x32xf32>
    %194 = arith.mulf %178, %186 : vector<2x32xf32>
    %195 = arith.addf %193, %194 : vector<2x32xf32>
    %196 = math.tanh %195 : vector<2x32xf32>
    %197 = arith.mulf %192, %196 : vector<2x32xf32>
    %c0_63 = arith.constant 0 : index
    %198 = arith.index_cast %167 : i32 to index
    %c0_64 = arith.constant 0 : index
    %c0_65 = arith.constant 0 : index
    %199 = vector.load %arg4[%c0_63, %198, %c0_64, %c0_65] : memref<1x8x2x32xf32, #tpu.memory_space<vmem>>, vector<1x1x2x32xf32>
    %200 = vector.shape_cast %199 : vector<1x1x2x32xf32> to vector<2x32xf32>
    %201 = vector.shape_cast %197 : vector<2x32xf32> to vector<1x1x2x32xf32>
    tpu.vector_store %arg4[%c0_63, %198, %c0_64, %c0_65], %201 {strides = array<i32>} : memref<1x8x2x32xf32, #tpu.memory_space<vmem>>, vector<1x1x2x32xf32>,
    %c5_i32 = arith.constant 5 : i32
    %c2_i32_66 = arith.constant 2 : i32
    %202 = arith.muli %c2_i32_66, %arg0 : i32
    %c1_i32_67 = arith.constant 1 : i32
    %203 = arith.subi %c1_i32_67, %202 : i32
    %204 = arith.muli %c5_i32, %203 : i32
    %c7_i32_68 = arith.constant 7 : i32
    %205 = arith.muli %arg0, %c7_i32_68 : i32
    %206 = arith.addi %204, %205 : i32
    %207 = arith.index_cast %206 : i32 to index
    %c0_69 = arith.constant 0 : index
    %c0_70 = arith.constant 0 : index
    %208 = vector.load %arg2[%207, %c0_69, %c0_70] : memref<8x2x128xf32, #tpu.memory_space<vmem>>, vector<1x2x128xf32>
    %209 = vector.shape_cast %208 : vector<1x2x128xf32> to vector<2x128xf32>
    %cst_71 = arith.constant dense<0.000000e+00> : vector<2x128xf32>
    %210 = tpu.matmul %197, %4, %cst_71 {dimension_numbers = #tpu.dot_dimension_numbers<[1], [0], [0], [1], [0, 0, 1, 1], [], []>} : vector<2x32xf32>, vector<32x128xf32>, vector<2x128xf32> -> vector<2x128xf32>
    %211 = arith.addf %209, %210 : vector<2x128xf32>
    %212 = vector.extract_strided_slice %211 {offsets = [0, 0], sizes = [2, 32], strides = [1, 1]} : vector<2x128xf32> to vector<2x32xf32>
    %213 = arith.negf %212 : vector<2x32xf32>
    %214 = math.exp %213 : vector<2x32xf32>
    %cst_72 = arith.constant 1.000000e+00 : f32
    %215 = vector.broadcast %cst_72 : f32 to vector<2x32xf32>
    %216 = arith.addf %215, %214 : vector<2x32xf32>
    %217 = arith.divf %215, %216 : vector<2x32xf32>
    %218 = vector.extract_strided_slice %211 {offsets = [0, 32], sizes = [2, 32], strides = [1, 1]} : vector<2x128xf32> to vector<2x32xf32>
    %219 = arith.negf %218 : vector<2x32xf32>
    %220 = math.exp %219 : vector<2x32xf32>
    %cst_73 = arith.constant 1.000000e+00 : f32
    %221 = vector.broadcast %cst_73 : f32 to vector<2x32xf32>
    %222 = arith.addf %221, %220 : vector<2x32xf32>
    %223 = arith.divf %221, %222 : vector<2x32xf32>
    %224 = vector.extract_strided_slice %211 {offsets = [0, 64], sizes = [2, 32], strides = [1, 1]} : vector<2x128xf32> to vector<2x32xf32>
    %225 = math.tanh %224 : vector<2x32xf32>
    %226 = vector.extract_strided_slice %211 {offsets = [0, 96], sizes = [2, 32], strides = [1, 1]} : vector<2x128xf32> to vector<2x32xf32>
    %227 = arith.negf %226 : vector<2x32xf32>
    %228 = math.exp %227 : vector<2x32xf32>
    %cst_74 = arith.constant 1.000000e+00 : f32
    %229 = vector.broadcast %cst_74 : f32 to vector<2x32xf32>
    %230 = arith.addf %229, %228 : vector<2x32xf32>
    %231 = arith.divf %229, %230 : vector<2x32xf32>
    %232 = arith.mulf %223, %195 : vector<2x32xf32>
    %233 = arith.mulf %217, %225 : vector<2x32xf32>
    %234 = arith.addf %232, %233 : vector<2x32xf32>
    %235 = math.tanh %234 : vector<2x32xf32>
    %236 = arith.mulf %231, %235 : vector<2x32xf32>
    %c0_75 = arith.constant 0 : index
    %237 = arith.index_cast %206 : i32 to index
    %c0_76 = arith.constant 0 : index
    %c0_77 = arith.constant 0 : index
    %238 = vector.load %arg4[%c0_75, %237, %c0_76, %c0_77] : memref<1x8x2x32xf32, #tpu.memory_space<vmem>>, vector<1x1x2x32xf32>
    %239 = vector.shape_cast %238 : vector<1x1x2x32xf32> to vector<2x32xf32>
    %240 = vector.shape_cast %236 : vector<2x32xf32> to vector<1x1x2x32xf32>
    tpu.vector_store %arg4[%c0_75, %237, %c0_76, %c0_77], %240 {strides = array<i32>} : memref<1x8x2x32xf32, #tpu.memory_space<vmem>>, vector<1x1x2x32xf32>,
    %c6_i32 = arith.constant 6 : i32
    %c2_i32_78 = arith.constant 2 : i32
    %241 = arith.muli %c2_i32_78, %arg0 : i32
    %c1_i32_79 = arith.constant 1 : i32
    %242 = arith.subi %c1_i32_79, %241 : i32
    %243 = arith.muli %c6_i32, %242 : i32
    %c7_i32_80 = arith.constant 7 : i32
    %244 = arith.muli %arg0, %c7_i32_80 : i32
    %245 = arith.addi %243, %244 : i32
    %246 = arith.index_cast %245 : i32 to index
    %c0_81 = arith.constant 0 : index
    %c0_82 = arith.constant 0 : index
    %247 = vector.load %arg2[%246, %c0_81, %c0_82] : memref<8x2x128xf32, #tpu.memory_space<vmem>>, vector<1x2x128xf32>
    %248 = vector.shape_cast %247 : vector<1x2x128xf32> to vector<2x128xf32>
    %cst_83 = arith.constant dense<0.000000e+00> : vector<2x128xf32>
    %249 = tpu.matmul %236, %4, %cst_83 {dimension_numbers = #tpu.dot_dimension_numbers<[1], [0], [0], [1], [0, 0, 1, 1], [], []>} : vector<2x32xf32>, vector<32x128xf32>, vector<2x128xf32> -> vector<2x128xf32>
    %250 = arith.addf %248, %249 : vector<2x128xf32>
    %251 = vector.extract_strided_slice %250 {offsets = [0, 0], sizes = [2, 32], strides = [1, 1]} : vector<2x128xf32> to vector<2x32xf32>
    %252 = arith.negf %251 : vector<2x32xf32>
    %253 = math.exp %252 : vector<2x32xf32>
    %cst_84 = arith.constant 1.000000e+00 : f32
    %254 = vector.broadcast %cst_84 : f32 to vector<2x32xf32>
    %255 = arith.addf %254, %253 : vector<2x32xf32>
    %256 = arith.divf %254, %255 : vector<2x32xf32>
    %257 = vector.extract_strided_slice %250 {offsets = [0, 32], sizes = [2, 32], strides = [1, 1]} : vector<2x128xf32> to vector<2x32xf32>
    %258 = arith.negf %257 : vector<2x32xf32>
    %259 = math.exp %258 : vector<2x32xf32>
    %cst_85 = arith.constant 1.000000e+00 : f32
    %260 = vector.broadcast %cst_85 : f32 to vector<2x32xf32>
    %261 = arith.addf %260, %259 : vector<2x32xf32>
    %262 = arith.divf %260, %261 : vector<2x32xf32>
    %263 = vector.extract_strided_slice %250 {offsets = [0, 64], sizes = [2, 32], strides = [1, 1]} : vector<2x128xf32> to vector<2x32xf32>
    %264 = math.tanh %263 : vector<2x32xf32>
    %265 = vector.extract_strided_slice %250 {offsets = [0, 96], sizes = [2, 32], strides = [1, 1]} : vector<2x128xf32> to vector<2x32xf32>
    %266 = arith.negf %265 : vector<2x32xf32>
    %267 = math.exp %266 : vector<2x32xf32>
    %cst_86 = arith.constant 1.000000e+00 : f32
    %268 = vector.broadcast %cst_86 : f32 to vector<2x32xf32>
    %269 = arith.addf %268, %267 : vector<2x32xf32>
    %270 = arith.divf %268, %269 : vector<2x32xf32>
    %271 = arith.mulf %262, %234 : vector<2x32xf32>
    %272 = arith.mulf %256, %264 : vector<2x32xf32>
    %273 = arith.addf %271, %272 : vector<2x32xf32>
    %274 = math.tanh %273 : vector<2x32xf32>
    %275 = arith.mulf %270, %274 : vector<2x32xf32>
    %c0_87 = arith.constant 0 : index
    %276 = arith.index_cast %245 : i32 to index
    %c0_88 = arith.constant 0 : index
    %c0_89 = arith.constant 0 : index
    %277 = vector.load %arg4[%c0_87, %276, %c0_88, %c0_89] : memref<1x8x2x32xf32, #tpu.memory_space<vmem>>, vector<1x1x2x32xf32>
    %278 = vector.shape_cast %277 : vector<1x1x2x32xf32> to vector<2x32xf32>
    %279 = vector.shape_cast %275 : vector<2x32xf32> to vector<1x1x2x32xf32>
    tpu.vector_store %arg4[%c0_87, %276, %c0_88, %c0_89], %279 {strides = array<i32>} : memref<1x8x2x32xf32, #tpu.memory_space<vmem>>, vector<1x1x2x32xf32>,
    %c7_i32_90 = arith.constant 7 : i32
    %c2_i32_91 = arith.constant 2 : i32
    %280 = arith.muli %c2_i32_91, %arg0 : i32
    %c1_i32_92 = arith.constant 1 : i32
    %281 = arith.subi %c1_i32_92, %280 : i32
    %282 = arith.muli %c7_i32_90, %281 : i32
    %c7_i32_93 = arith.constant 7 : i32
    %283 = arith.muli %arg0, %c7_i32_93 : i32
    %284 = arith.addi %282, %283 : i32
    %285 = arith.index_cast %284 : i32 to index
    %c0_94 = arith.constant 0 : index
    %c0_95 = arith.constant 0 : index
    %286 = vector.load %arg2[%285, %c0_94, %c0_95] : memref<8x2x128xf32, #tpu.memory_space<vmem>>, vector<1x2x128xf32>
    %287 = vector.shape_cast %286 : vector<1x2x128xf32> to vector<2x128xf32>
    %cst_96 = arith.constant dense<0.000000e+00> : vector<2x128xf32>
    %288 = tpu.matmul %275, %4, %cst_96 {dimension_numbers = #tpu.dot_dimension_numbers<[1], [0], [0], [1], [0, 0, 1, 1], [], []>} : vector<2x32xf32>, vector<32x128xf32>, vector<2x128xf32> -> vector<2x128xf32>
    %289 = arith.addf %287, %288 : vector<2x128xf32>
    %290 = vector.extract_strided_slice %289 {offsets = [0, 0], sizes = [2, 32], strides = [1, 1]} : vector<2x128xf32> to vector<2x32xf32>
    %291 = arith.negf %290 : vector<2x32xf32>
    %292 = math.exp %291 : vector<2x32xf32>
    %cst_97 = arith.constant 1.000000e+00 : f32
    %293 = vector.broadcast %cst_97 : f32 to vector<2x32xf32>
    %294 = arith.addf %293, %292 : vector<2x32xf32>
    %295 = arith.divf %293, %294 : vector<2x32xf32>
    %296 = vector.extract_strided_slice %289 {offsets = [0, 32], sizes = [2, 32], strides = [1, 1]} : vector<2x128xf32> to vector<2x32xf32>
    %297 = arith.negf %296 : vector<2x32xf32>
    %298 = math.exp %297 : vector<2x32xf32>
    %cst_98 = arith.constant 1.000000e+00 : f32
    %299 = vector.broadcast %cst_98 : f32 to vector<2x32xf32>
    %300 = arith.addf %299, %298 : vector<2x32xf32>
    %301 = arith.divf %299, %300 : vector<2x32xf32>
    %302 = vector.extract_strided_slice %289 {offsets = [0, 64], sizes = [2, 32], strides = [1, 1]} : vector<2x128xf32> to vector<2x32xf32>
    %303 = math.tanh %302 : vector<2x32xf32>
    %304 = vector.extract_strided_slice %289 {offsets = [0, 96], sizes = [2, 32], strides = [1, 1]} : vector<2x128xf32> to vector<2x32xf32>
    %305 = arith.negf %304 : vector<2x32xf32>
    %306 = math.exp %305 : vector<2x32xf32>
    %cst_99 = arith.constant 1.000000e+00 : f32
    %307 = vector.broadcast %cst_99 : f32 to vector<2x32xf32>
    %308 = arith.addf %307, %306 : vector<2x32xf32>
    %309 = arith.divf %307, %308 : vector<2x32xf32>
    %310 = arith.mulf %301, %273 : vector<2x32xf32>
    %311 = arith.mulf %295, %303 : vector<2x32xf32>
    %312 = arith.addf %310, %311 : vector<2x32xf32>
    %313 = math.tanh %312 : vector<2x32xf32>
    %314 = arith.mulf %309, %313 : vector<2x32xf32>
    %c0_100 = arith.constant 0 : index
    %315 = arith.index_cast %284 : i32 to index
    %c0_101 = arith.constant 0 : index
    %c0_102 = arith.constant 0 : index
    %316 = vector.load %arg4[%c0_100, %315, %c0_101, %c0_102] : memref<1x8x2x32xf32, #tpu.memory_space<vmem>>, vector<1x1x2x32xf32>
    %317 = vector.shape_cast %316 : vector<1x1x2x32xf32> to vector<2x32xf32>
    %318 = vector.shape_cast %314 : vector<2x32xf32> to vector<1x1x2x32xf32>
    tpu.vector_store %arg4[%c0_100, %315, %c0_101, %c0_102], %318 {strides = array<i32>} : memref<1x8x2x32xf32, #tpu.memory_space<vmem>>, vector<1x1x2x32xf32>,
    %c8_i32 = arith.constant 8 : i32
    %c0_103 = arith.constant 0 : index
    %c0_104 = arith.constant 0 : index
    %319 = vector.load %arg5[%c0_103, %c0_104] : memref<2x32xf32, #tpu.memory_space<vmem>>, vector<2x32xf32>
    tpu.vector_store %arg5[%c0_103, %c0_104], %314 {strides = array<i32>} : memref<2x32xf32, #tpu.memory_space<vmem>>, vector<2x32xf32>,
    %c0_105 = arith.constant 0 : index
    %c0_106 = arith.constant 0 : index
    %320 = vector.load %arg6[%c0_105, %c0_106] : memref<2x32xf32, #tpu.memory_space<vmem>>, vector<2x32xf32>
    tpu.vector_store %arg6[%c0_105, %c0_106], %312 {strides = array<i32>} : memref<2x32xf32, #tpu.memory_space<vmem>>, vector<2x32xf32>,
    return
  }
  func.func @transform_0(%arg0: i32, %arg1: i32) -> (i32, i32, i32) {
    %c2_i32 = arith.constant 2 : i32
    %0 = arith.muli %c2_i32, %arg0 : i32
    %c1_i32 = arith.constant 1 : i32
    %1 = arith.subi %c1_i32, %0 : i32
    %2 = arith.muli %arg1, %1 : i32
    %c0_i32 = arith.constant 0 : i32
    %3 = arith.muli %arg0, %c0_i32 : i32
    %4 = arith.addi %2, %3 : i32
    %c0_i32_0 = arith.constant 0 : i32
    %c0_i32_1 = arith.constant 0 : i32
    return %4, %c0_i32_0, %arg0 : i32, i32, i32
  }
  func.func @transform_1(%arg0: i32, %arg1: i32) -> (i32, i32, i32) {
    %c0_i32 = arith.constant 0 : i32
    %c0_i32_0 = arith.constant 0 : i32
    %c0_i32_1 = arith.constant 0 : i32
    return %arg0, %c0_i32, %c0_i32_0 : i32, i32, i32
  }
  func.func @transform_2(%arg0: i32, %arg1: i32) -> (i32, i32, i32, i32) {
    %c2_i32 = arith.constant 2 : i32
    %0 = arith.muli %c2_i32, %arg0 : i32
    %c1_i32 = arith.constant 1 : i32
    %1 = arith.subi %c1_i32, %0 : i32
    %2 = arith.muli %arg1, %1 : i32
    %c0_i32 = arith.constant 0 : i32
    %3 = arith.muli %arg0, %c0_i32 : i32
    %4 = arith.addi %2, %3 : i32
    %c0_i32_0 = arith.constant 0 : i32
    %c0_i32_1 = arith.constant 0 : i32
    %c0_i32_2 = arith.constant 0 : i32
    return %arg0, %4, %c0_i32_0, %c0_i32_1 : i32, i32, i32, i32
  }
}

module attributes {stable_mosaic.version = 11 : i64} {
  func.func @_linear_kernel(%arg0: i32, %arg1: memref<1x16x32xf32, #tpu.memory_space<vmem>>, %arg2: memref<1x16x32xf32, #tpu.memory_space<vmem>>, %arg3: memref<32x16xf32, #tpu.memory_space<vmem>>, %arg4: memref<32x16xf32, #tpu.memory_space<vmem>>, %arg5: memref<1x16xf32, #tpu.memory_space<vmem>>, %arg6: memref<16x16xf32, #tpu.memory_space<vmem>>) attributes {dimension_semantics = [#tpu.dimension_semantics<parallel>], iteration_bounds = array<i64: 1>, scalar_prefetch = 0 : i64, scratch_operands = 0 : i64, tpu.core_type = #tpu.core_type<tc>, window_params = [{transform_indices = @transform_0, window_bounds = array<i64: 1, 16, 32>}, {transform_indices = @transform_1, window_bounds = array<i64: 1, 16, 32>}, {pipeline_mode = #tpu.pipeline_mode<synchronous>, transform_indices = @transform_2, window_bounds = array<i64: 32, 16>}, {pipeline_mode = #tpu.pipeline_mode<synchronous>, transform_indices = @transform_3, window_bounds = array<i64: 32, 16>}, {pipeline_mode = #tpu.pipeline_mode<synchronous>, transform_indices = @transform_4, window_bounds = array<i64: 1, 16>}, {transform_indices = @transform_5, window_bounds = array<i64: 16, 16>}]} {
    %c0 = arith.constant 0 : index
    %c0_0 = arith.constant 0 : index
    %c0_1 = arith.constant 0 : index
    %0 = vector.load %arg1[%c0, %c0_0, %c0_1] : memref<1x16x32xf32, #tpu.memory_space<vmem>>, vector<1x16x32xf32>
    %1 = vector.shape_cast %0 : vector<1x16x32xf32> to vector<16x32xf32>
    %c0_2 = arith.constant 0 : index
    %c0_3 = arith.constant 0 : index
    %2 = vector.load %arg3[%c0_2, %c0_3] : memref<32x16xf32, #tpu.memory_space<vmem>>, vector<32x16xf32>
    %cst = arith.constant dense<0.000000e+00> : vector<16x16xf32>
    %3 = tpu.matmul %1, %2, %cst {dimension_numbers = #tpu.dot_dimension_numbers<[1], [0], [0], [1], [0, 0, 1, 1], [], []>} : vector<16x32xf32>, vector<32x16xf32>, vector<16x16xf32> -> vector<16x16xf32>
    %c0_4 = arith.constant 0 : index
    %c0_5 = arith.constant 0 : index
    %c0_6 = arith.constant 0 : index
    %4 = vector.load %arg2[%c0_4, %c0_5, %c0_6] : memref<1x16x32xf32, #tpu.memory_space<vmem>>, vector<1x16x32xf32>
    %5 = vector.shape_cast %4 : vector<1x16x32xf32> to vector<16x32xf32>
    %c0_7 = arith.constant 0 : index
    %c0_8 = arith.constant 0 : index
    %6 = vector.load %arg4[%c0_7, %c0_8] : memref<32x16xf32, #tpu.memory_space<vmem>>, vector<32x16xf32>
    %cst_9 = arith.constant dense<0.000000e+00> : vector<16x16xf32>
    %7 = tpu.matmul %5, %6, %cst_9 {dimension_numbers = #tpu.dot_dimension_numbers<[1], [0], [0], [1], [0, 0, 1, 1], [], []>} : vector<16x32xf32>, vector<32x16xf32>, vector<16x16xf32> -> vector<16x16xf32>
    %8 = arith.addf %3, %7 : vector<16x16xf32>
    %c0_10 = arith.constant 0 : index
    %c0_11 = arith.constant 0 : index
    %9 = vector.load %arg5[%c0_10, %c0_11] : memref<1x16xf32, #tpu.memory_space<vmem>>, vector<1x16xf32>
    %10 = vector.broadcast %9 : vector<1x16xf32> to vector<16x16xf32>
    %11 = arith.addf %8, %10 : vector<16x16xf32>
    %c0_12 = arith.constant 0 : index
    %c0_13 = arith.constant 0 : index
    %12 = vector.load %arg6[%c0_12, %c0_13] : memref<16x16xf32, #tpu.memory_space<vmem>>, vector<16x16xf32>
    tpu.vector_store %arg6[%c0_12, %c0_13], %11 {strides = array<i32>} : memref<16x16xf32, #tpu.memory_space<vmem>>, vector<16x16xf32>,
    return
  }
  func.func @transform_0(%arg0: i32) -> (i32, i32, i32) {
    %c0_i32 = arith.constant 0 : i32
    %c0_i32_0 = arith.constant 0 : i32
    %c0_i32_1 = arith.constant 0 : i32
    return %c0_i32, %arg0, %c0_i32_0 : i32, i32, i32
  }
  func.func @transform_1(%arg0: i32) -> (i32, i32, i32) {
    %c1_i32 = arith.constant 1 : i32
    %c0_i32 = arith.constant 0 : i32
    %c0_i32_0 = arith.constant 0 : i32
    return %c1_i32, %arg0, %c0_i32 : i32, i32, i32
  }
  func.func @transform_2(%arg0: i32) -> (i32, i32) {
    %c0_i32 = arith.constant 0 : i32
    %c0_i32_0 = arith.constant 0 : i32
    %c0_i32_1 = arith.constant 0 : i32
    return %c0_i32, %c0_i32_0 : i32, i32
  }
  func.func @transform_3(%arg0: i32) -> (i32, i32) {
    %c0_i32 = arith.constant 0 : i32
    %c0_i32_0 = arith.constant 0 : i32
    %c0_i32_1 = arith.constant 0 : i32
    return %c0_i32, %c0_i32_0 : i32, i32
  }
  func.func @transform_4(%arg0: i32) -> (i32, i32) {
    %c0_i32 = arith.constant 0 : i32
    %c0_i32_0 = arith.constant 0 : i32
    %c0_i32_1 = arith.constant 0 : i32
    return %c0_i32, %c0_i32_0 : i32, i32
  }
  func.func @transform_5(%arg0: i32) -> (i32, i32) {
    %c0_i32 = arith.constant 0 : i32
    %c0_i32_0 = arith.constant 0 : i32
    return %arg0, %c0_i32 : i32, i32
  }
}

</mosaic_0001>

<llo_original>
// kernel: bidirectional_lstm.3
$region0: #{bidirectional_lstm.3}
  #allocation0 [shape = 'u32[]', space=smem, size = 0x4, offset = 0x4, fixed_abs, tag = 'smem constant byte address 0x4 - core index']
  #allocation1 [shape = 'u32[72,128]{1,0:T(1,128)}', space=vmem, size = 0x9000, scoped, tag = 'internal scratch']
  %s0 = inlined_call_operand.vmem [shape: f32[16,32], index: 0, kind: input, shape index: {}]
  %s1 = inlined_call_operand.vmem [shape: f32[32,256], index: 1, kind: input, shape index: {}]
  %s2 = inlined_call_operand.vmem [shape: f32[1,256], index: 2, kind: input, shape index: {}]
  %s3 = inlined_call_operand.vmem [shape: f32[16,256], index: 3, kind: output, shape index: {}]
  %s4 = sld [smem:[#allocation0]]
  $region22: #{bidirectional_lstm.3} parent=0
    _
  %s6 = ssub.s32 1, %s4
  %s7 = scalar_select 0, %s6, %s4
  // Predicated region
  $region2: #{bidirectional_lstm.3} parent=0 // pred_check
    _
  $region3: #{bidirectional_lstm.3} parent=0 // pred_check_branch
    %9 = sbr.rel (0) target = $region5
  $region4: #{bidirectional_lstm.3} parent=0 // pred_region
    _
  $region5: #{bidirectional_lstm.3} parent=0 // pred_fallthru
    _
  // Predicated region
  $region6: #{bidirectional_lstm.3} parent=0 // pred_check
    _
  $region7: #{bidirectional_lstm.3} parent=0 // pred_check_branch
    %11 = sbr.rel (0) target = $region9
  $region8: #{bidirectional_lstm.3} parent=0 // pred_region
    _
  $region9: #{bidirectional_lstm.3} parent=0 // pred_fallthru
    _
  // Predicated region
  $region10: #{bidirectional_lstm.3} parent=0 // pred_check
    _
  $region11: #{bidirectional_lstm.3} parent=0 // pred_check_branch
    %13 = sbr.rel (0) target = $region13
  $region12: #{bidirectional_lstm.3} parent=0 // pred_region
    _
  $region13: #{bidirectional_lstm.3} parent=0 // pred_fallthru
    _
  %v14 = vld [vmem:[%s0] sm:$0xff]
  %v15 = vld [vmem:[%s0 + $0x8] sm:$0xff]
  %v16 = vld [vmem:[%s1] sm:$0xff]
  %v17 = vld [vmem:[%s1 + $0x8] sm:$0xff]
  %v18 = vld [vmem:[%s1 + $0x10] sm:$0xff]
  %v19 = vld [vmem:[%s1 + $0x18] sm:$0xff]
  %v20 = vld [vmem:[%s1 + $0x20] sm:$0xff]
  %v21 = vld [vmem:[%s1 + $0x28] sm:$0xff]
  %v22 = vld [vmem:[%s1 + $0x30] sm:$0xff]
  %v23 = vld [vmem:[%s1 + $0x38] sm:$0xff]
  %v24 = vld [vmem:[%s2] sm:$0x3]
  %v26 = vperm.slane %v24, 0
  %v27 = vperm.slane %v24, 1
  %vm30 = vcmask 261120
  %v32 = vsel %vm30, %v14, 0
  %v35 = vsel %vm30, %v15, 0
  %37 = vmatpush.msra.mxu0 0.0
  %38 = vmatpush.msra.mxu0 0.0
  %39 = vmatpush.msra.mxu0 0.0
  %40 = vmatpush.msra.mxu0 0.0
  %41 = vmatpush.msra.mxu0 0.0
  %42 = vmatpush.msra.mxu0 0.0
  %43 = vmatpush.msra.mxu0 0.0
  %44 = vmatpush.msra.mxu0 0.0
  %45 = vmatpush.msra.mxu0 0.0
  %46 = vmatpush.msra.mxu0 0.0
  %47 = vmatpush.msra.mxu0 0.0
  %48 = vmatpush.msra.mxu0 0.0
  %49 = vmatpush.msra.mxu0 %v22
  %50 = vmatpush.msra.mxu0 %v20
  %51 = vmatpush.msra.mxu0 %v18
  %52 = vmatpush.msra.mxu0 %v16
  %53 = vmatmul.f32.gmra.mxu0 %v32
  %v54 = vpop.f32.mrf.mxu0
  %v55 = vadd.f32 %v26, %v54
  %56 = vmatmul.f32.gmra.mxu0 %v35
  %v57 = vpop.f32.mrf.mxu0
  %v58 = vadd.f32 %v26, %v57
  %59 = vdwg.mxu0
  %60 = vmatpush.msra.mxu0 0.0
  %61 = vmatpush.msra.mxu0 0.0
  %62 = vmatpush.msra.mxu0 0.0
  %63 = vmatpush.msra.mxu0 0.0
  %64 = vmatpush.msra.mxu0 0.0
  %65 = vmatpush.msra.mxu0 0.0
  %66 = vmatpush.msra.mxu0 0.0
  %67 = vmatpush.msra.mxu0 0.0
  %68 = vmatpush.msra.mxu0 0.0
  %69 = vmatpush.msra.mxu0 0.0
  %70 = vmatpush.msra.mxu0 0.0
  %71 = vmatpush.msra.mxu0 0.0
  %72 = vmatpush.msra.mxu0 %v23
  %73 = vmatpush.msra.mxu0 %v21
  %74 = vmatpush.msra.mxu0 %v19
  %75 = vmatpush.msra.mxu0 %v17
  %76 = vmatmul.f32.gmra.mxu0 %v32
  %v77 = vpop.f32.mrf.mxu0
  %v78 = vadd.f32 %v27, %v77
  %79 = vmatmul.f32.gmra.mxu0 %v35
  %v80 = vpop.f32.mrf.mxu0
  %v81 = vadd.f32 %v27, %v80
  %82 = vdwg.mxu0
  %83 = vst [vmem:[%s3] sm:$0xff] %v55
  %84 = vst [vmem:[%s3 + $0x8] sm:$0xff] %v78
  %85 = vst [vmem:[%s3 + $0x10] sm:$0xff] %v58
  %86 = vst [vmem:[%s3 + $0x18] sm:$0xff] %v81
  // Predicated region
  $region14: #{bidirectional_lstm.3} parent=0 // pred_check
    _
  $region15: #{bidirectional_lstm.3} parent=0 // pred_check_branch
    %88 = sbr.rel (0) target = $region17
  $region16: #{bidirectional_lstm.3} parent=0 // pred_region
    _
  $region17: #{bidirectional_lstm.3} parent=0 // pred_fallthru
    _
  // Predicated region
  $region18: #{bidirectional_lstm.3} parent=0 // pred_check
    _
  $region19: #{bidirectional_lstm.3} parent=0 // pred_check_branch
    %90 = sbr.rel (0) target = $region21
  $region20: #{bidirectional_lstm.3} parent=0 // pred_region
    _
  $region21: #{bidirectional_lstm.3} parent=0 // pred_fallthru
    _

// kernel: bidirectional_lstm.5
$region0: #{bidirectional_lstm.5}
  #allocation0 [shape = 'u32[]', space=smem, size = 0x4, offset = 0x4, fixed_abs, tag = 'smem constant byte address 0x4 - core index']
  #allocation1 [shape = 'u32[72,128]{1,0:T(1,128)}', space=vmem, size = 0x9000, scoped, tag = 'internal scratch']
  %s0 = inlined_call_operand.vmem [shape: f32[2,16,32], index: 0, kind: input, shape index: {}, may-alias: {0,1}]
  %s1 = inlined_call_operand.vmem [shape: f32[2,16,32], index: 1, kind: input, shape index: {}, may-alias: {0,1}]
  %s2 = inlined_call_operand.vmem [shape: f32[32,16], index: 2, kind: input, shape index: {}]
  %s3 = inlined_call_operand.vmem [shape: f32[32,16], index: 3, kind: input, shape index: {}]
  %s4 = inlined_call_operand.vmem [shape: f32[1,16], index: 4, kind: input, shape index: {}]
  %s5 = inlined_call_operand.hbm [shape: f32[16,16], index: 5, kind: output, shape index: {}]
  %s6 = sld [smem:[#allocation0]]
  $region30: #{bidirectional_lstm.5} parent=0
    _
  %s8 = ssub.s32 1, %s6
  %s9 = scalar_select 0, %s8, %s6
  $region1: #{bidirectional_lstm.5} parent=0
    #allocation2 [shape = 'u8[8192]{0}', space=vmem, size = 0x2000, scoped, tag = 'output window, operand 0, single buffered']
    #allocation3 [shape = 's32[1]{0}', space=sflag, size = 0x4, scoped, tag = 'scoped memory for bidirectional_lstm.5']
    %10 = vsyncpa [#allocation3], 0
    // Predicated region
    $region2: #{bidirectional_lstm.5} parent=1 // pred_check
      _
    $region3: #{bidirectional_lstm.5} parent=1 // pred_check_branch
      %12 = sbr.rel (0) target = $region5
    $region4: #{bidirectional_lstm.5} parent=1 // pred_region
      _
    $region5: #{bidirectional_lstm.5} parent=1 // pred_fallthru
      _
    // Predicated region
    $region6: #{bidirectional_lstm.5} parent=1 // pred_check
      _
    $region7: #{bidirectional_lstm.5} parent=1 // pred_check_branch
      %14 = sbr.rel (0) target = $region9
    $region8: #{bidirectional_lstm.5} parent=1 // pred_region
      %s15 = scalar_lea.vmem %s1, 16
    $region9: #{bidirectional_lstm.5} parent=1 // pred_fallthru
      _
    // Predicated region
    $region10: #{bidirectional_lstm.5} parent=1 // pred_check
      _
    $region11: #{bidirectional_lstm.5} parent=1 // pred_check_branch
      %17 = sbr.rel (0) target = $region13
    $region12: #{bidirectional_lstm.5} parent=1 // pred_region
      _
    $region13: #{bidirectional_lstm.5} parent=1 // pred_fallthru
      _
    // Predicated region
    $region14: #{bidirectional_lstm.5} parent=1 // pred_check
      _
    $region15: #{bidirectional_lstm.5} parent=1 // pred_check_branch
      %19 = sbr.rel (0) target = $region17
    $region16: #{bidirectional_lstm.5} parent=1 // pred_region
      _
    $region17: #{bidirectional_lstm.5} parent=1 // pred_fallthru
      _
    // Predicated region
    $region18: #{bidirectional_lstm.5} parent=1 // pred_check
      _
    $region19: #{bidirectional_lstm.5} parent=1 // pred_check_branch
      %21 = sbr.rel (0) target = $region21
    $region20: #{bidirectional_lstm.5} parent=1 // pred_region
      _
    $region21: #{bidirectional_lstm.5} parent=1 // pred_fallthru
      _
    %s22 = scalar_lea.vmem %s1, 16
    %s23 = scalar_lea.vmem %s1, 16
    %v24 = vld [vmem:[%s0] sm:$0xff]
    %v25 = vld [vmem:[%s0 + $0x8] sm:$0xff]
    %v26 = vld [vmem:[%s2] sm:$0xff]
    %v27 = vld [vmem:[%s2 + $0x8] sm:$0xff]
    %v28 = vld [vmem:[%s2 + $0x10] sm:$0xff]
    %v29 = vld [vmem:[%s2 + $0x18] sm:$0xff]
    %v30 = vld [vmem:[%s23] sm:$0xff]
    %v31 = vld [vmem:[%s23 + $0x8] sm:$0xff]
    %v32 = vld [vmem:[%s3] sm:$0xff]
    %v33 = vld [vmem:[%s3 + $0x8] sm:$0xff]
    %v34 = vld [vmem:[%s3 + $0x10] sm:$0xff]
    %v35 = vld [vmem:[%s3 + $0x18] sm:$0xff]
    %vm36 = vcmask 261120
    %v38 = vsel %vm36, %v30, 0
    %v41 = vsel %vm36, %v31, 0
    %43 = vmatpush.msra.mxu0 0.0
    %44 = vmatpush.msra.mxu0 0.0
    %45 = vmatpush.msra.mxu0 0.0
    %46 = vmatpush.msra.mxu0 0.0
    %47 = vmatpush.msra.mxu0 0.0
    %48 = vmatpush.msra.mxu0 0.0
    %49 = vmatpush.msra.mxu0 0.0
    %50 = vmatpush.msra.mxu0 0.0
    %51 = vmatpush.msra.mxu0 0.0
    %52 = vmatpush.msra.mxu0 0.0
    %53 = vmatpush.msra.mxu0 0.0
    %54 = vmatpush.msra.mxu0 0.0
    %55 = vmatpush.msra.mxu0 %v35
    %56 = vmatpush.msra.mxu0 %v34
    %57 = vmatpush.msra.mxu0 %v33
    %58 = vmatpush.msra.mxu0 %v32
    %59 = vmatmul.f32.gmra.mxu0 %v38
    %v60 = vpop.f32.mrf.mxu0
    %v61 = vadd.f32 0.0, %v60
    %62 = vmatmul.f32.gmra.mxu0 %v41
    %v63 = vpop.f32.mrf.mxu0
    %v64 = vadd.f32 0.0, %v63
    %65 = vdwg.mxu0
    %v67 = vsel %vm36, %v24, 0
    %v70 = vsel %vm36, %v25, 0
    %72 = vmatpush.msra.mxu0 0.0
    %73 = vmatpush.msra.mxu0 0.0
    %74 = vmatpush.msra.mxu0 0.0
    %75 = vmatpush.msra.mxu0 0.0
    %76 = vmatpush.msra.mxu0 0.0
    %77 = vmatpush.msra.mxu0 0.0
    %78 = vmatpush.msra.mxu0 0.0
    %79 = vmatpush.msra.mxu0 0.0
    %80 = vmatpush.msra.mxu0 0.0
    %81 = vmatpush.msra.mxu0 0.0
    %82 = vmatpush.msra.mxu0 0.0
    %83 = vmatpush.msra.mxu0 0.0
    %84 = vmatpush.msra.mxu0 %v29
    %85 = vmatpush.msra.mxu0 %v28
    %86 = vmatpush.msra.mxu0 %v27
    %87 = vmatpush.msra.mxu0 %v26
    %88 = vmatmul.f32.gmra.mxu0 %v67
    %v89 = vpop.f32.mrf.mxu0
    %v90 = vadd.f32 %v61, %v89
    %91 = vmatmul.f32.gmra.mxu0 %v70
    %v92 = vpop.f32.mrf.mxu0
    %v93 = vadd.f32 %v64, %v92
    %94 = vdwg.mxu0
    %v95 = vld [vmem:[%s4] sm:$0x1]
    %v97 = vperm.slane %v95, 0
    %v99 = vadd.f32 %v90, %v97
    %v100 = vadd.f32 %v93, %v97
    %vm101 = vcmask 130048
    %102 = vst.msk [vmem:[#allocation2] sm:$0xff] %vm101, %v99
    %103 = vst.msk [vmem:[#allocation2 + $0x8] sm:$0xff] %vm101, %v100
    // Predicated region
    $region22: #{bidirectional_lstm.5} parent=1 // pred_check
      _
    $region23: #{bidirectional_lstm.5} parent=1 // pred_check_branch
      %105 = sbr.rel (0) target = $region25
    $region24: #{bidirectional_lstm.5} parent=1 // pred_region
      %107 = vsyncadd [#allocation3], 0
      %s108 = sshll.u32 [#allocation2], 4
      %s109 = int_to_ptr.vmem [resolvable:$true] %s108
      %s110 = sshll.u32 %s5, 4
      %s111 = int_to_ptr.hbm [resolvable:$true] %s110
      %116 = dma.vmem_to_hbm [thread:$0]  %s109, 256, %s111, [#allocation3], 128, 128, 8
    $region25: #{bidirectional_lstm.5} parent=1 // pred_fallthru
      _
    // Predicated region
    $region26: #{bidirectional_lstm.5} parent=1 // pred_check
      _
    $region27: #{bidirectional_lstm.5} parent=1 // pred_check_branch
      %118 = sbr.rel (0) target = $region29
    $region28: #{bidirectional_lstm.5} parent=1 // pred_region
      %120 = dma.done [#allocation3], 256
    $region29: #{bidirectional_lstm.5} parent=1 // pred_fallthru
      _
    %121 = vsyncpa [#allocation3], 1

// kernel: bidirectional_lstm.4
$region0: #{bidirectional_lstm.4}
  #allocation0 [shape = 'u32[]', space=smem, size = 0x4, offset = 0x4, fixed_abs, tag = 'smem constant byte address 0x4 - core index']
  #allocation1 [shape = 'u32[72,128]{1,0:T(1,128)}', space=vmem, size = 0x9000, scoped, tag = 'internal scratch']
  #allocation2 [shape = 'f32[2,32]{1,0:T(2,128)}', space=vmem, size = 0x400, scoped, tag = 'scratch operand']
  #allocation3 [shape = 'f32[2,32]{1,0:T(2,128)}', space=vmem, size = 0x400, scoped, tag = 'scratch operand']
  %s0 = inlined_call_operand.vmem [shape: f32[8,2,256], index: 0, kind: input, shape index: {}]
  %s1 = inlined_call_operand.vmem [shape: f32[2,32,128], index: 1, kind: input, shape index: {}]
  %s2 = inlined_call_operand.vmem [shape: f32[2,8,2,32], index: 2, kind: output, shape index: {}]
  %s3 = sld [smem:[#allocation0]]
  $region86: #{bidirectional_lstm.4} parent=0
    _
  %s5 = ssub.s32 1, %s3
  %s6 = scalar_select 0, %s5, %s3
  $region1: #{bidirectional_lstm.4} parent=0
    #allocation4 [shape = 'u8[16384]{0}', space=vmem, size = 0x4000, scoped, tag = 'input window, operand 0']
    loop: start=0, step=1, limit=4
    $region2: #{bidirectional_lstm.4} parent=1 // loop_pre_header
      _
    $region3: #{bidirectional_lstm.4} parent=1 // loop_header
      %s8 = sphi 0, %s12
      %p9 = scmp.ge.s32.totalorder %s8, 4
      %s15 = sphi 0, %s27
      %s16 = sphi 0, %s23
      %s17 = sphi 0, %s15
      %s18 = sphi 0, %s16
      %s19 = sphi 0, %s17
      %s20 = sphi 0, %s18
      %s38 = sphi 0, %s40
      %s41 = sphi 0, %s38
      %s42 = sphi 0, %s41
      %s58 = sphi 0, %s42
      %s64 = sphi 0, %s66
      %s67 = sphi 0, %s64
      %s68 = sphi 0, %s67
      %s84 = sphi 0, %s68
      %s98 = sphi 0, %s100
      %s101 = sphi 0, %s98
      %s102 = sphi 0, %s101
      %s118 = sphi 0, %s102
    $region4: #{bidirectional_lstm.4} parent=1 // loop_header_branch
      %11 = sbr.rel (%p9) target = $region8
    $region5: #{bidirectional_lstm.4} parent=1 // loop_body
      %s13 = ssub.s32 %s8, 1
      %s14 = ssub.s32 %s8, 2
      %s21 = sadd.s32 1, %s16
      %p22 = scmp.ge.s32.totalorder %s21, 1
      %s23 = scalar_select %p22, 0, %s21
      %s24 = sadd.s32 1, %s15
      %s25 = scalar_select %p22, %s24, %s15
      %p26 = scmp.ge.s32.totalorder %s25, 2
      %s27 = scalar_select %p26, 0, %s25
      %s28 = smul.u32 %s15, 2
      %s29 = ssub.s32 1, %s28
      %s30 = smul.u32 %s16, %s29
      %s31 = smul.u32 %s27, 2
      %s32 = ssub.s32 1, %s31
      %s33 = smul.u32 %s23, %s32
      %s34 = ssub.s32 %s30, %s33
      %s35 = ssub.s32 %s15, %s27
      %s36 = sor.u32 %s34, %s35
      %p37 = scmp.eq.s32.totalorder %s36, 0
      %s39 = sadd.s32 %s38, 1
      %s40 = scalar_select %p37, %s38, %s39
      %p43 = pneg %p37
      %p44 = scmp.eq.s32.totalorder %s8, 1
      %p45 = por %p43, %p44
      %p46 = scmp.ne.s32.totalorder %s38, %s41
      %p47 = scmp.eq.s32.totalorder %s8, 0
      %p48 = por %p46, %p47
      %p49 = scmp.ne.s32.totalorder %s38, %s41
      %p50 = scmp.eq.s32.totalorder %s13, 1
      %p51 = por %p49, %p50
      %p52 = scmp.ne.s32.totalorder %s41, %s42
      %p53 = scmp.eq.s32.totalorder %s13, 0
      %p54 = por %p52, %p53
      %p55 = scmp.ne.s32.totalorder %s41, %s42
      %p56 = scmp.eq.s32.totalorder %s14, 1
      %p57 = por %p55, %p56
      %p59 = scmp.ne.s32.totalorder %s42, %s58
      %p60 = scmp.eq.s32.totalorder %s14, 0
      %p61 = por %p59, %p60
      %s62 = ssub.s32 %s15, %s27
      %p63 = scmp.eq.s32.totalorder %s62, 0
      %s65 = sadd.s32 %s64, 1
      %s66 = scalar_select %p63, %s64, %s65
      %p69 = pneg %p63
      %p70 = scmp.eq.s32.totalorder %s8, 1
      %p71 = por %p69, %p70
      %p72 = scmp.ne.s32.totalorder %s64, %s67
      %p73 = scmp.eq.s32.totalorder %s8, 0
      %p74 = por %p72, %p73
      %p75 = scmp.ne.s32.totalorder %s64, %s67
      %p76 = scmp.eq.s32.totalorder %s13, 1
      %p77 = por %p75, %p76
      %p78 = scmp.ne.s32.totalorder %s67, %s68
      %p79 = scmp.eq.s32.totalorder %s13, 0
      %p80 = por %p78, %p79
      %p81 = scmp.ne.s32.totalorder %s67, %s68
      %p82 = scmp.eq.s32.totalorder %s14, 1
      %p83 = por %p81, %p82
      %p85 = scmp.ne.s32.totalorder %s68, %s84
      %p86 = scmp.eq.s32.totalorder %s14, 0
      %p87 = por %p85, %p86
      %s88 = smul.u32 %s15, 2
      %s89 = ssub.s32 1, %s88
      %s90 = smul.u32 %s16, %s89
      %s91 = smul.u32 %s27, 2
      %s92 = ssub.s32 1, %s91
      %s93 = smul.u32 %s23, %s92
      %s94 = ssub.s32 %s15, %s27
      %s95 = ssub.s32 %s90, %s93
      %s96 = sor.u32 %s94, %s95
      %p97 = scmp.eq.s32.totalorder %s96, 0
      %s99 = sadd.s32 %s98, 1
      %s100 = scalar_select %p97, %s98, %s99
      %p103 = pneg %p97
      %p104 = scmp.eq.s32.totalorder %s8, 1
      %p105 = por %p103, %p104
      %p106 = scmp.ne.s32.totalorder %s98, %s101
      %p107 = scmp.eq.s32.totalorder %s8, 0
      %p108 = por %p106, %p107
      %p109 = scmp.ne.s32.totalorder %s98, %s101
      %p110 = scmp.eq.s32.totalorder %s13, 1
      %p111 = por %p109, %p110
      %p112 = scmp.ne.s32.totalorder %s101, %s102
      %p113 = scmp.eq.s32.totalorder %s13, 0
      %p114 = por %p112, %p113
      %p115 = scmp.ne.s32.totalorder %s101, %s102
      %p116 = scmp.eq.s32.totalorder %s14, 1
      %p117 = por %p115, %p116
      %p119 = scmp.ne.s32.totalorder %s102, %s118
      %p120 = scmp.eq.s32.totalorder %s14, 0
      %p121 = por %p119, %p120
      %p122 = scmp.le.s32.totalorder 1, %s8
      %p123 = scmp.lt.s32.totalorder %s8, 3
      %p124 = pnand %p122, %p123
      %p125 = pneg %p124
      // Predicated region
      $region9: #{bidirectional_lstm.4} parent=5 // pred_check
        _
      $region10: #{bidirectional_lstm.4} parent=5 // pred_check_branch
        %127 = sbr.rel (%p124) target = $region12
      $region11: #{bidirectional_lstm.4} parent=5 // pred_region
        %s128 = ssub.s32 %s8, 1
      $region12: #{bidirectional_lstm.4} parent=5 // pred_fallthru
        _
      %p129 = scmp.lt.s32.totalorder %s8, 2
      // Predicated region
      $region13: #{bidirectional_lstm.4} parent=5 // pred_check
        %p130 = pneg %p129
      $region14: #{bidirectional_lstm.4} parent=5 // pred_check_branch
        %132 = sbr.rel (%p130) target = $region16
      $region15: #{bidirectional_lstm.4} parent=5 // pred_region
        // Predicated region
        $region17: #{bidirectional_lstm.4} parent=15 // pred_check
          %p133 = pneg %p48
        $region18: #{bidirectional_lstm.4} parent=15 // pred_check_branch
          %135 = sbr.rel (%p133) target = $region20
        $region19: #{bidirectional_lstm.4} parent=15 // pred_region
          %s136 = sand.u32 %s38, 1
          %s137 = sand.u32 %s38, 1
          %s138 = smul.addr %s137, 16
          %s139 = scalar_lea.vmem [#allocation4], %s138
          %s140 = smul.u32 %s15, 2
          %s141 = ssub.s32 1, %s140
          %s142 = smul.u32 %s16, %s141
          %s143 = smul.u32 8, %s142
          %s144 = smul.addr %s143, 2
          %s145 = sadd.s32 %s15, %s144
          %s146 = smul.addr %s145, 2
          %s147 = scalar_lea.vmem %s0, %s146
          // Predicated region
          $region21: #{bidirectional_lstm.4} parent=19 // pred_check
            _
          $region22: #{bidirectional_lstm.4} parent=19 // pred_check_branch
            %149 = sbr.rel (0) target = $region24
          $region23: #{bidirectional_lstm.4} parent=19 // pred_region
            // Predicated region
            $region25: #{bidirectional_lstm.4} parent=23 // pred_check
              _
            $region26: #{bidirectional_lstm.4} parent=23 // pred_check_branch
              %151 = sbr.rel target = $region28
            $region27: #{bidirectional_lstm.4} parent=23 // pred_region
              // Predicated region
              $region40: #{bidirectional_lstm.4} parent=27 // pred_check
                _
              $region41: #{bidirectional_lstm.4} parent=27 // pred_check_branch
                %181 = sbr.rel (0) target = $region43
              $region42: #{bidirectional_lstm.4} parent=27 // pred_region
                loop: start=0, step=1, limit=1
                $region44: #{bidirectional_lstm.4} parent=42 // loop_pre_header
                  _
                $region45: #{bidirectional_lstm.4} parent=42 // loop_header
                  %s183 = sphi 0, %s187
                  %p184 = scmp.ge.s32.totalorder %s183, 1
                  %s188 = sphi %s147, %s147
                  %s189 = sphi %s139, %s139
                $region46: #{bidirectional_lstm.4} parent=42 // loop_header_branch
                  %186 = sbr.rel (%p184) target = $region50
                $region47: #{bidirectional_lstm.4} parent=42 // loop_body
                  _
                $region48: #{bidirectional_lstm.4} parent=42 // loop_footer
                  %s187 = sadd.s32 1, %s183
                $region49: #{bidirectional_lstm.4} parent=42 // loop_footer_branch
                  %182 = sbr.rel target = $region45
                $region50: #{bidirectional_lstm.4} parent=42 // loop_exit
                  _
                %s191 = ssub.s32 4, 1
                loop: start=0, step=1, limit=1
                $region51: #{bidirectional_lstm.4} parent=42 // loop_pre_header
                  _
                $region52: #{bidirectional_lstm.4} parent=42 // loop_header
                  %s193 = sphi 0, %s197
                  %p194 = scmp.ge.s32.totalorder %s193, 1
                  %s198 = sphi %s147, %s147
                  %s199 = sphi %s139, %s139
                $region53: #{bidirectional_lstm.4} parent=42 // loop_header_branch
                  %196 = sbr.rel (%p194) target = $region57
                $region54: #{bidirectional_lstm.4} parent=42 // loop_body
                  %v200 = vld [vmem:[%s198] sm:%s191]
                  %201 = vst [vmem:[%s199] sm:%s191] %v200
                  %v202 = vld [vmem:[%s198 + $0x4] sm:%s191]
                  %203 = vst [vmem:[%s199 + $0x2] sm:%s191] %v202
                  %v204 = vld [vmem:[%s198 + $0x8] sm:%s191]
                  %205 = vst [vmem:[%s199 + $0x4] sm:%s191] %v204
                  %v206 = vld [vmem:[%s198 + $0xc] sm:%s191]
                  %207 = vst [vmem:[%s199 + $0x6] sm:%s191] %v206
                  %v208 = vld [vmem:[%s198 + $0x10] sm:%s191]
                  %209 = vst [vmem:[%s199 + $0x8] sm:%s191] %v208
                  %v210 = vld [vmem:[%s198 + $0x14] sm:%s191]
                  %211 = vst [vmem:[%s199 + $0xa] sm:%s191] %v210
                  %v212 = vld [vmem:[%s198 + $0x18] sm:%s191]
                  %213 = vst [vmem:[%s199 + $0xc] sm:%s191] %v212
                  %v214 = vld [vmem:[%s198 + $0x1c] sm:%s191]
                  %215 = vst [vmem:[%s199 + $0xe] sm:%s191] %v214
                $region55: #{bidirectional_lstm.4} parent=42 // loop_footer
                  %s197 = sadd.s32 1, %s193
                $region56: #{bidirectional_lstm.4} parent=42 // loop_footer_branch
                  %192 = sbr.rel target = $region52
                $region57: #{bidirectional_lstm.4} parent=42 // loop_exit
                  _
              $region43: #{bidirectional_lstm.4} parent=27 // pred_fallthru
                _
            $region28: #{bidirectional_lstm.4} parent=23 // pred_fallthru
              _
            // Predicated region
            $region29: #{bidirectional_lstm.4} parent=23 // pred_check
              _
            $region30: #{bidirectional_lstm.4} parent=23 // pred_check_branch
              %153 = sbr.rel (0) target = $region32
            $region31: #{bidirectional_lstm.4} parent=23 // pred_region
              %s155 = ssub.s32 4, 1
              loop: start=0, step=1, limit=1
              $region33: #{bidirectional_lstm.4} parent=31 // loop_pre_header
                _
              $region34: #{bidirectional_lstm.4} parent=31 // loop_header
                %s157 = sphi 0, %s161
                %p158 = scmp.ge.s32.totalorder %s157, 1
                %s162 = sphi %s147, %s147
                %s163 = sphi %s139, %s139
              $region35: #{bidirectional_lstm.4} parent=31 // loop_header_branch
                %160 = sbr.rel (%p158) target = $region39
              $region36: #{bidirectional_lstm.4} parent=31 // loop_body
                %v164 = vld [vmem:[%s162] sm:%s155]
                %165 = vst [vmem:[%s163] sm:%s155] %v164
                %v166 = vld [vmem:[%s162 + $0x4] sm:%s155]
                %167 = vst [vmem:[%s163 + $0x2] sm:%s155] %v166
                %v168 = vld [vmem:[%s162 + $0x8] sm:%s155]
                %169 = vst [vmem:[%s163 + $0x4] sm:%s155] %v168
                %v170 = vld [vmem:[%s162 + $0xc] sm:%s155]
                %171 = vst [vmem:[%s163 + $0x6] sm:%s155] %v170
                %v172 = vld [vmem:[%s162 + $0x10] sm:%s155]
                %173 = vst [vmem:[%s163 + $0x8] sm:%s155] %v172
                %v174 = vld [vmem:[%s162 + $0x14] sm:%s155]
                %175 = vst [vmem:[%s163 + $0xa] sm:%s155] %v174
                %v176 = vld [vmem:[%s162 + $0x18] sm:%s155]
                %177 = vst [vmem:[%s163 + $0xc] sm:%s155] %v176
                %v178 = vld [vmem:[%s162 + $0x1c] sm:%s155]
                %179 = vst [vmem:[%s163 + $0xe] sm:%s155] %v178
              $region37: #{bidirectional_lstm.4} parent=31 // loop_footer
                %s161 = sadd.s32 1, %s157
              $region38: #{bidirectional_lstm.4} parent=31 // loop_footer_branch
                %156 = sbr.rel target = $region34
              $region39: #{bidirectional_lstm.4} parent=31 // loop_exit
                _
            $region32: #{bidirectional_lstm.4} parent=23 // pred_fallthru
              _
          $region24: #{bidirectional_lstm.4} parent=19 // pred_fallthru
            _
          %216 = vnop
        $region20: #{bidirectional_lstm.4} parent=15 // pred_fallthru
          _
        // Predicated region
        $region58: #{bidirectional_lstm.4} parent=15 // pred_check
          %p217 = pneg %p74
        $region59: #{bidirectional_lstm.4} parent=15 // pred_check_branch
          %219 = sbr.rel (%p217) target = $region61
        $region60: #{bidirectional_lstm.4} parent=15 // pred_region
          %p220 = scmp.lt.s32.totalorder %s15, 1
          %s221 = scalar_select %p220, %s15, 1
          %s222 = smul.addr %s221, 4
          %s223 = smul.addr %s222, 8
          %s224 = scalar_lea.vmem %s1, %s223
        $region61: #{bidirectional_lstm.4} parent=15 // pred_fallthru
          _
      $region16: #{bidirectional_lstm.4} parent=5 // pred_fallthru
        _
      %p225 = scmp.le.s32.totalorder 1, %s8
      %p226 = scmp.lt.s32.totalorder %s8, 3
      %p227 = pnand %p225, %p226
      %p228 = pneg %p227
      // Predicated region
      $region62: #{bidirectional_lstm.4} parent=5 // pred_check
        _
      $region63: #{bidirectional_lstm.4} parent=5 // pred_check_branch
        %230 = sbr.rel (%p227) target = $region65
      $region64: #{bidirectional_lstm.4} parent=5 // pred_region
        %s231 = ssub.s32 %s8, 1
        %s232 = sand.u32 %s41, 1
        %s233 = sand.u32 %s41, 1
        %s234 = smul.addr %s233, 16
        %s235 = scalar_lea.vmem [#allocation4], %s234
        // Predicated region
        $region66: #{bidirectional_lstm.4} parent=64 // pred_check
          %p236 = pneg %p54
        $region67: #{bidirectional_lstm.4} parent=64 // pred_check_branch
          %238 = sbr.rel (%p236) target = $region69
        $region68: #{bidirectional_lstm.4} parent=64 // pred_region
          _
        $region69: #{bidirectional_lstm.4} parent=64 // pred_fallthru
          _
        %s239 = sand.u32 %s41, 1
        %s240 = sand.u32 %s41, 1
        %s241 = smul.addr %s240, 16
        %s242 = scalar_lea.vmem [#allocation4], %s241
        %p243 = pneg %p54
        %p244 = pneg %p51
        %p245 = scmp.lt.s32.totalorder %s17, 1
        %s246 = scalar_select %p245, %s17, 1
        %s247 = smul.addr %s246, 4
        %s248 = smul.addr %s247, 8
        %s249 = scalar_lea.vmem %s1, %s248
        %p250 = pneg %p80
        %p251 = pneg %p77
        %p252 = pneg %p114
        %p253 = pneg %p111
        %s254 = smul.u32 %s17, 2
        %s255 = ssub.s32 1, %s254
        %s256 = smul.u32 %s18, %s255
        %s257 = smul.u32 8, %s256
        %p258 = scmp.lt.s32.totalorder %s17, 1
        %s259 = scalar_select %p258, %s17, 1
        %p260 = scmp.lt.s32.totalorder %s257, 7
        %s261 = scalar_select %p260, %s257, 7
        %s262 = smul.addr %s259, 8
        %s263 = sadd.s32 %s261, %s262
        %s264 = smul.addr %s263, 2
        %s265 = scalar_lea.vmem %s2, %s264
        %s266 = smul.u32 %s17, 2
        %s267 = ssub.s32 1, %s266
        %s268 = smul.u32 %s18, %s267
        %s269 = smul.u32 8, %s268
        %p270 = scmp.lt.s32.totalorder %s17, 1
        %s271 = scalar_select %p270, %s17, 1
        %s272 = smul.addr %s271, 4
        %s273 = smul.addr %s272, 8
        %s274 = scalar_lea.vmem %s1, %s273
        %s275 = smul.u32 %s17, 2
        %s276 = ssub.s32 1, %s275
        %s277 = smul.u32 %s18, %s276
        %s278 = smul.u32 8, %s277
        %p279 = scmp.lt.s32.totalorder %s17, 1
        %s280 = scalar_select %p279, %s17, 1
        %p281 = scmp.lt.s32.totalorder %s278, 7
        %s282 = scalar_select %p281, %s278, 7
        %s283 = smul.addr %s280, 8
        %s284 = sadd.s32 %s282, %s283
        %s285 = smul.addr %s284, 2
        %s286 = scalar_lea.vmem %s2, %s285
        %s287 = smul.u32 %s17, 2
        %s288 = ssub.s32 1, %s287
        %s289 = smul.u32 %s18, %s288
        %s290 = smul.u32 8, %s289
        %p291 = scmp.eq.s32.totalorder %s18, 0
        // Predicated region
        $region70: #{bidirectional_lstm.4} parent=64 // pred_check
          %p292 = pneg %p291
        $region71: #{bidirectional_lstm.4} parent=64 // pred_check_branch
          %294 = sbr.rel (%p292) target = $region73
        $region72: #{bidirectional_lstm.4} parent=64 // pred_region
          %vm295 = vcmask 254976
          %296 = vst.msk [vmem:[#allocation2] sm:$0x3] %vm295, 0.0
          %297 = vst.msk [vmem:[#allocation3] sm:$0x3] %vm295, 0.0
        $region73: #{bidirectional_lstm.4} parent=64 // pred_fallthru
          _
        %v298 = vld [vmem:[%s274] sm:$0xff]
        %v299 = vld [vmem:[%s274 + $0x8] sm:$0xff]
        %v300 = vld [vmem:[%s274 + $0x10] sm:$0xff]
        %v301 = vld [vmem:[%s274 + $0x18] sm:$0xff]
        %v302 = vld [vmem:[#allocation2] sm:$0x3]
        %v303 = vld [vmem:[#allocation3] sm:$0x3]
        %s304 = smul.u32 %s17, 7
        %s305 = smul.u32 %s304, 2
        %s306 = scalar_lea.vmem %s235, %s305 [#allocation4]
        %v307 = vld [vmem:[%s306] sm:$0x3]
        %vm308 = vcmask 261120
        %v310 = vsel %vm308, %v302, 0
        %312 = vmatpush.msra.mxu0 0.0
        %313 = vmatpush.msra.mxu0 0.0
        %314 = vmatpush.msra.mxu0 0.0
        %315 = vmatpush.msra.mxu0 0.0
        %316 = vmatpush.msra.mxu0 0.0
        %317 = vmatpush.msra.mxu0 0.0
        %318 = vmatpush.msra.mxu0 0.0
        %319 = vmatpush.msra.mxu0 0.0
        %320 = vmatpush.msra.mxu0 0.0
        %321 = vmatpush.msra.mxu0 0.0
        %322 = vmatpush.msra.mxu0 0.0
        %323 = vmatpush.msra.mxu0 0.0
        %324 = vmatpush.msra.mxu0 %v301
        %325 = vmatpush.msra.mxu0 %v300
        %326 = vmatpush.msra.mxu0 %v299
        %327 = vmatpush.msra.mxu0 %v298
        %328 = vmatmul.f32.gmra.mxu0 %v310
        %v329 = vpop.f32.mrf.mxu0
        %v330 = vadd.f32 0.0, %v329
        %331 = vdwg.mxu0
        %v332 = vadd.f32 %v307, %v330
        %v333 = vxor.u32 %v332, 2147483648
        %v334 = vmul.f32 %v333, 1.442695
        %v335 = vpow.pop %v334
        %v336 = vadd.f32 %v335, 1.0
        %v337 = vrcp.pop %v336
        %v338 = vmul.f32 %v336, %v337
        %v339 = vsub.f32 1.0, %v338
        %v340 = vmul.f32 %v337, %v339
        %v341 = vadd.f32 %v337, %v340
        %vm342 = vweird.f32 %v336
        %vm343 = vweird.f32 %v337
        %vm344 = vmor %vm342, %vm343
        %v345 = vsel %vm344, %v337, %v341
        %v346 = vand.u32 2147483647, %v336
        %vm347 = vcmp.eq.f32.partialorder %v346, 8.507059e+37
        %v348 = vand.u32 %v336, 2147483648
        %v349 = vor.u32 1.1754944e-38, %v348
        %v350 = vsel %vm347, %v349, %v345
        %v351 = vmul.f32 1.0, %v350
        %v352 = vtanh.pop %v332
        %354 = vrot.lane.b32.xlu0 %v303, 32
        %v355 = vpop.permute.xlu0 %354
        %v357 = vmul.f32 %v351, %v355
        %359 = vrot.lane.b32.xlu0 %v352, 64
        %v360 = vpop.permute.xlu0 %359
        %v362 = vmul.f32 %v351, %v360
        %364 = vrot.lane.b32.xlu0 %v362, 32
        %v365 = vpop.permute.xlu0 %364
        %v367 = vadd.f32 %v357, %v365
        %v368 = vtanh.pop %v367
        %370 = vrot.lane.b32.xlu0 %v368, 64
        %v371 = vpop.permute.xlu0 %370
        %v373 = vmul.f32 %v351, %v371
        %375 = vrot.lane.b32.xlu0 %v373, 32
        %v376 = vpop.permute.xlu0 %375
        %s378 = scalar_lea.vmem %s286, %s305
        %vm379 = vcmask 254976
        %380 = vst.msk [vmem:[%s378] sm:$0x3] %vm379, %v376
        %s381 = smul.u32 %s17, 2
        %s382 = ssub.s32 1, %s381
        %s383 = sadd.s32 %s382, %s304
        %s384 = smul.u32 %s383, 2
        %s385 = scalar_lea.vmem %s235, %s384 [#allocation4]
        %v386 = vld [vmem:[%s385] sm:$0x3]
        %v387 = vsel %vm308, %v376, 0
        %389 = vmatpush.msra.mxu0 0.0
        %390 = vmatpush.msra.mxu0 0.0
        %391 = vmatpush.msra.mxu0 0.0
        %392 = vmatpush.msra.mxu0 0.0
        %393 = vmatpush.msra.mxu0 0.0
        %394 = vmatpush.msra.mxu0 0.0
        %395 = vmatpush.msra.mxu0 0.0
        %396 = vmatpush.msra.mxu0 0.0
        %397 = vmatpush.msra.mxu0 0.0
        %398 = vmatpush.msra.mxu0 0.0
        %399 = vmatpush.msra.mxu0 0.0
        %400 = vmatpush.msra.mxu0 0.0
        %401 = vmatpush.msra.mxu0 %v301
        %402 = vmatpush.msra.mxu0 %v300
        %403 = vmatpush.msra.mxu0 %v299
        %404 = vmatpush.msra.mxu0 %v298
        %405 = vmatmul.f32.gmra.mxu0 %v387
        %v406 = vpop.f32.mrf.mxu0
        %v407 = vadd.f32 0.0, %v406
        %408 = vdwg.mxu0
        %v409 = vadd.f32 %v386, %v407
        %v410 = vxor.u32 %v409, 2147483648
        %v411 = vmul.f32 %v410, 1.442695
        %v412 = vpow.pop %v411
        %v413 = vadd.f32 %v412, 1.0
        %v414 = vrcp.pop %v413
        %v415 = vmul.f32 %v413, %v414
        %v416 = vsub.f32 1.0, %v415
        %v417 = vmul.f32 %v414, %v416
        %v418 = vadd.f32 %v414, %v417
        %vm419 = vweird.f32 %v413
        %vm420 = vweird.f32 %v414
        %vm421 = vmor %vm419, %vm420
        %v422 = vsel %vm421, %v414, %v418
        %v423 = vand.u32 2147483647, %v413
        %vm424 = vcmp.eq.f32.partialorder %v423, 8.507059e+37
        %v425 = vand.u32 %v413, 2147483648
        %v426 = vor.u32 1.1754944e-38, %v425
        %v427 = vsel %vm424, %v426, %v422
        %v428 = vmul.f32 1.0, %v427
        %v429 = vtanh.pop %v409
        %v430 = vmul.f32 %v428, %v367
        %432 = vrot.lane.b32.xlu0 %v429, 64
        %v433 = vpop.permute.xlu0 %432
        %v435 = vmul.f32 %v428, %v433
        %437 = vrot.lane.b32.xlu0 %v435, 32
        %v438 = vpop.permute.xlu0 %437
        %v440 = vadd.f32 %v430, %v438
        %v441 = vtanh.pop %v440
        %443 = vrot.lane.b32.xlu0 %v441, 64
        %v444 = vpop.permute.xlu0 %443
        %v446 = vmul.f32 %v428, %v444
        %448 = vrot.lane.b32.xlu0 %v446, 32
        %v449 = vpop.permute.xlu0 %448
        %s451 = scalar_lea.vmem %s286, %s384
        %452 = vst.msk [vmem:[%s451] sm:$0x3] %vm379, %v449
        %s453 = smul.u32 %s382, 2
        %s454 = sadd.s32 %s453, %s304
        %s455 = smul.u32 %s454, 2
        %s456 = scalar_lea.vmem %s235, %s455 [#allocation4]
        %v457 = vld [vmem:[%s456] sm:$0x3]
        %v458 = vsel %vm308, %v449, 0
        %460 = vmatpush.msra.mxu0 0.0
        %461 = vmatpush.msra.mxu0 0.0
        %462 = vmatpush.msra.mxu0 0.0
        %463 = vmatpush.msra.mxu0 0.0
        %464 = vmatpush.msra.mxu0 0.0
        %465 = vmatpush.msra.mxu0 0.0
        %466 = vmatpush.msra.mxu0 0.0
        %467 = vmatpush.msra.mxu0 0.0
        %468 = vmatpush.msra.mxu0 0.0
        %469 = vmatpush.msra.mxu0 0.0
        %470 = vmatpush.msra.mxu0 0.0
        %471 = vmatpush.msra.mxu0 0.0
        %472 = vmatpush.msra.mxu0 %v301
        %473 = vmatpush.msra.mxu0 %v300
        %474 = vmatpush.msra.mxu0 %v299
        %475 = vmatpush.msra.mxu0 %v298
        %476 = vmatmul.f32.gmra.mxu0 %v458
        %v477 = vpop.f32.mrf.mxu0
        %v478 = vadd.f32 0.0, %v477
        %479 = vdwg.mxu0
        %v480 = vadd.f32 %v457, %v478
        %v481 = vxor.u32 %v480, 2147483648
        %v482 = vmul.f32 %v481, 1.442695
        %v483 = vpow.pop %v482
        %v484 = vadd.f32 %v483, 1.0
        %v485 = vrcp.pop %v484
        %v486 = vmul.f32 %v484, %v485
        %v487 = vsub.f32 1.0, %v486
        %v488 = vmul.f32 %v485, %v487
        %v489 = vadd.f32 %v485, %v488
        %vm490 = vweird.f32 %v484
        %vm491 = vweird.f32 %v485
        %vm492 = vmor %vm490, %vm491
        %v493 = vsel %vm492, %v485, %v489
        %v494 = vand.u32 2147483647, %v484
        %vm495 = vcmp.eq.f32.partialorder %v494, 8.507059e+37
        %v496 = vand.u32 %v484, 2147483648
        %v497 = vor.u32 1.1754944e-38, %v496
        %v498 = vsel %vm495, %v497, %v493
        %v499 = vmul.f32 1.0, %v498
        %v500 = vtanh.pop %v480
        %v501 = vmul.f32 %v499, %v440
        %503 = vrot.lane.b32.xlu0 %v500, 64
        %v504 = vpop.permute.xlu0 %503
        %v506 = vmul.f32 %v499, %v504
        %508 = vrot.lane.b32.xlu0 %v506, 32
        %v509 = vpop.permute.xlu0 %508
        %v511 = vadd.f32 %v501, %v509
        %v512 = vtanh.pop %v511
        %514 = vrot.lane.b32.xlu0 %v512, 64
        %v515 = vpop.permute.xlu0 %514
        %v517 = vmul.f32 %v499, %v515
        %519 = vrot.lane.b32.xlu0 %v517, 32
        %v520 = vpop.permute.xlu0 %519
        %s522 = scalar_lea.vmem %s286, %s455
        %523 = vst.msk [vmem:[%s522] sm:$0x3] %vm379, %v520
        %s524 = smul.u32 %s382, 3
        %s525 = sadd.s32 %s524, %s304
        %s526 = smul.u32 %s525, 2
        %s527 = scalar_lea.vmem %s235, %s526 [#allocation4]
        %v528 = vld [vmem:[%s527] sm:$0x3]
        %v529 = vsel %vm308, %v520, 0
        %531 = vmatpush.msra.mxu0 0.0
        %532 = vmatpush.msra.mxu0 0.0
        %533 = vmatpush.msra.mxu0 0.0
        %534 = vmatpush.msra.mxu0 0.0
        %535 = vmatpush.msra.mxu0 0.0
        %536 = vmatpush.msra.mxu0 0.0
        %537 = vmatpush.msra.mxu0 0.0
        %538 = vmatpush.msra.mxu0 0.0
        %539 = vmatpush.msra.mxu0 0.0
        %540 = vmatpush.msra.mxu0 0.0
        %541 = vmatpush.msra.mxu0 0.0
        %542 = vmatpush.msra.mxu0 0.0
        %543 = vmatpush.msra.mxu0 %v301
        %544 = vmatpush.msra.mxu0 %v300
        %545 = vmatpush.msra.mxu0 %v299
        %546 = vmatpush.msra.mxu0 %v298
        %547 = vmatmul.f32.gmra.mxu0 %v529
        %v548 = vpop.f32.mrf.mxu0
        %v549 = vadd.f32 0.0, %v548
        %550 = vdwg.mxu0
        %v551 = vadd.f32 %v528, %v549
        %v552 = vxor.u32 %v551, 2147483648
        %v553 = vmul.f32 %v552, 1.442695
        %v554 = vpow.pop %v553
        %v555 = vadd.f32 %v554, 1.0
        %v556 = vrcp.pop %v555
        %v557 = vmul.f32 %v555, %v556
        %v558 = vsub.f32 1.0, %v557
        %v559 = vmul.f32 %v556, %v558
        %v560 = vadd.f32 %v556, %v559
        %vm561 = vweird.f32 %v555
        %vm562 = vweird.f32 %v556
        %vm563 = vmor %vm561, %vm562
        %v564 = vsel %vm563, %v556, %v560
        %v565 = vand.u32 2147483647, %v555
        %vm566 = vcmp.eq.f32.partialorder %v565, 8.507059e+37
        %v567 = vand.u32 %v555, 2147483648
        %v568 = vor.u32 1.1754944e-38, %v567
        %v569 = vsel %vm566, %v568, %v564
        %v570 = vmul.f32 1.0, %v569
        %v571 = vtanh.pop %v551
        %v572 = vmul.f32 %v570, %v511
        %574 = vrot.lane.b32.xlu0 %v571, 64
        %v575 = vpop.permute.xlu0 %574
        %v577 = vmul.f32 %v570, %v575
        %579 = vrot.lane.b32.xlu0 %v577, 32
        %v580 = vpop.permute.xlu0 %579
        %v582 = vadd.f32 %v572, %v580
        %v583 = vtanh.pop %v582
        %585 = vrot.lane.b32.xlu0 %v583, 64
        %v586 = vpop.permute.xlu0 %585
        %v588 = vmul.f32 %v570, %v586
        %590 = vrot.lane.b32.xlu0 %v588, 32
        %v591 = vpop.permute.xlu0 %590
        %s593 = scalar_lea.vmem %s286, %s526
        %594 = vst.msk [vmem:[%s593] sm:$0x3] %vm379, %v591
        %s595 = smul.u32 %s382, 4
        %s596 = sadd.s32 %s595, %s304
        %s597 = smul.u32 %s596, 2
        %s598 = scalar_lea.vmem %s235, %s597 [#allocation4]
        %v599 = vld [vmem:[%s598] sm:$0x3]
        %v600 = vsel %vm308, %v591, 0
        %602 = vmatpush.msra.mxu0 0.0
        %603 = vmatpush.msra.mxu0 0.0
        %604 = vmatpush.msra.mxu0 0.0
        %605 = vmatpush.msra.mxu0 0.0
        %606 = vmatpush.msra.mxu0 0.0
        %607 = vmatpush.msra.mxu0 0.0
        %608 = vmatpush.msra.mxu0 0.0
        %609 = vmatpush.msra.mxu0 0.0
        %610 = vmatpush.msra.mxu0 0.0
        %611 = vmatpush.msra.mxu0 0.0
        %612 = vmatpush.msra.mxu0 0.0
        %613 = vmatpush.msra.mxu0 0.0
        %614 = vmatpush.msra.mxu0 %v301
        %615 = vmatpush.msra.mxu0 %v300
        %616 = vmatpush.msra.mxu0 %v299
        %617 = vmatpush.msra.mxu0 %v298
        %618 = vmatmul.f32.gmra.mxu0 %v600
        %v619 = vpop.f32.mrf.mxu0
        %v620 = vadd.f32 0.0, %v619
        %621 = vdwg.mxu0
        %v622 = vadd.f32 %v599, %v620
        %v623 = vxor.u32 %v622, 2147483648
        %v624 = vmul.f32 %v623, 1.442695
        %v625 = vpow.pop %v624
        %v626 = vadd.f32 %v625, 1.0
        %v627 = vrcp.pop %v626
        %v628 = vmul.f32 %v626, %v627
        %v629 = vsub.f32 1.0, %v628
        %v630 = vmul.f32 %v627, %v629
        %v631 = vadd.f32 %v627, %v630
        %vm632 = vweird.f32 %v626
        %vm633 = vweird.f32 %v627
        %vm634 = vmor %vm632, %vm633
        %v635 = vsel %vm634, %v627, %v631
        %v636 = vand.u32 2147483647, %v626
        %vm637 = vcmp.eq.f32.partialorder %v636, 8.507059e+37
        %v638 = vand.u32 %v626, 2147483648
        %v639 = vor.u32 1.1754944e-38, %v638
        %v640 = vsel %vm637, %v639, %v635
        %v641 = vmul.f32 1.0, %v640
        %v642 = vtanh.pop %v622
        %v643 = vmul.f32 %v641, %v582
        %645 = vrot.lane.b32.xlu0 %v642, 64
        %v646 = vpop.permute.xlu0 %645
        %v648 = vmul.f32 %v641, %v646
        %650 = vrot.lane.b32.xlu0 %v648, 32
        %v651 = vpop.permute.xlu0 %650
        %v653 = vadd.f32 %v643, %v651
        %v654 = vtanh.pop %v653
        %656 = vrot.lane.b32.xlu0 %v654, 64
        %v657 = vpop.permute.xlu0 %656
        %v659 = vmul.f32 %v641, %v657
        %661 = vrot.lane.b32.xlu0 %v659, 32
        %v662 = vpop.permute.xlu0 %661
        %s664 = scalar_lea.vmem %s286, %s597
        %665 = vst.msk [vmem:[%s664] sm:$0x3] %vm379, %v662
        %s666 = smul.u32 %s382, 5
        %s667 = sadd.s32 %s666, %s304
        %s668 = smul.u32 %s667, 2
        %s669 = scalar_lea.vmem %s235, %s668 [#allocation4]
        %v670 = vld [vmem:[%s669] sm:$0x3]
        %v671 = vsel %vm308, %v662, 0
        %673 = vmatpush.msra.mxu0 0.0
        %674 = vmatpush.msra.mxu0 0.0
        %675 = vmatpush.msra.mxu0 0.0
        %676 = vmatpush.msra.mxu0 0.0
        %677 = vmatpush.msra.mxu0 0.0
        %678 = vmatpush.msra.mxu0 0.0
        %679 = vmatpush.msra.mxu0 0.0
        %680 = vmatpush.msra.mxu0 0.0
        %681 = vmatpush.msra.mxu0 0.0
        %682 = vmatpush.msra.mxu0 0.0
        %683 = vmatpush.msra.mxu0 0.0
        %684 = vmatpush.msra.mxu0 0.0
        %685 = vmatpush.msra.mxu0 %v301
        %686 = vmatpush.msra.mxu0 %v300
        %687 = vmatpush.msra.mxu0 %v299
        %688 = vmatpush.msra.mxu0 %v298
        %689 = vmatmul.f32.gmra.mxu0 %v671
        %v690 = vpop.f32.mrf.mxu0
        %v691 = vadd.f32 0.0, %v690
        %692 = vdwg.mxu0
        %v693 = vadd.f32 %v670, %v691
        %v694 = vxor.u32 %v693, 2147483648
        %v695 = vmul.f32 %v694, 1.442695
        %v696 = vpow.pop %v695
        %v697 = vadd.f32 %v696, 1.0
        %v698 = vrcp.pop %v697
        %v699 = vmul.f32 %v697, %v698
        %v700 = vsub.f32 1.0, %v699
        %v701 = vmul.f32 %v698, %v700
        %v702 = vadd.f32 %v698, %v701
        %vm703 = vweird.f32 %v697
        %vm704 = vweird.f32 %v698
        %vm705 = vmor %vm703, %vm704
        %v706 = vsel %vm705, %v698, %v702
        %v707 = vand.u32 2147483647, %v697
        %vm708 = vcmp.eq.f32.partialorder %v707, 8.507059e+37
        %v709 = vand.u32 %v697, 2147483648
        %v710 = vor.u32 1.1754944e-38, %v709
        %v711 = vsel %vm708, %v710, %v706
        %v712 = vmul.f32 1.0, %v711
        %v713 = vtanh.pop %v693
        %v714 = vmul.f32 %v712, %v653
        %716 = vrot.lane.b32.xlu0 %v713, 64
        %v717 = vpop.permute.xlu0 %716
        %v719 = vmul.f32 %v712, %v717
        %721 = vrot.lane.b32.xlu0 %v719, 32
        %v722 = vpop.permute.xlu0 %721
        %v724 = vadd.f32 %v714, %v722
        %v725 = vtanh.pop %v724
        %727 = vrot.lane.b32.xlu0 %v725, 64
        %v728 = vpop.permute.xlu0 %727
        %v730 = vmul.f32 %v712, %v728
        %732 = vrot.lane.b32.xlu0 %v730, 32
        %v733 = vpop.permute.xlu0 %732
        %s735 = scalar_lea.vmem %s286, %s668
        %736 = vst.msk [vmem:[%s735] sm:$0x3] %vm379, %v733
        %s737 = smul.u32 %s382, 6
        %s738 = sadd.s32 %s737, %s304
        %s739 = smul.u32 %s738, 2
        %s740 = scalar_lea.vmem %s235, %s739 [#allocation4]
        %v741 = vld [vmem:[%s740] sm:$0x3]
        %v742 = vsel %vm308, %v733, 0
        %744 = vmatpush.msra.mxu0 0.0
        %745 = vmatpush.msra.mxu0 0.0
        %746 = vmatpush.msra.mxu0 0.0
        %747 = vmatpush.msra.mxu0 0.0
        %748 = vmatpush.msra.mxu0 0.0
        %749 = vmatpush.msra.mxu0 0.0
        %750 = vmatpush.msra.mxu0 0.0
        %751 = vmatpush.msra.mxu0 0.0
        %752 = vmatpush.msra.mxu0 0.0
        %753 = vmatpush.msra.mxu0 0.0
        %754 = vmatpush.msra.mxu0 0.0
        %755 = vmatpush.msra.mxu0 0.0
        %756 = vmatpush.msra.mxu0 %v301
        %757 = vmatpush.msra.mxu0 %v300
        %758 = vmatpush.msra.mxu0 %v299
        %759 = vmatpush.msra.mxu0 %v298
        %760 = vmatmul.f32.gmra.mxu0 %v742
        %v761 = vpop.f32.mrf.mxu0
        %v762 = vadd.f32 0.0, %v761
        %763 = vdwg.mxu0
        %v764 = vadd.f32 %v741, %v762
        %v765 = vxor.u32 %v764, 2147483648
        %v766 = vmul.f32 %v765, 1.442695
        %v767 = vpow.pop %v766
        %v768 = vadd.f32 %v767, 1.0
        %v769 = vrcp.pop %v768
        %v770 = vmul.f32 %v768, %v769
        %v771 = vsub.f32 1.0, %v770
        %v772 = vmul.f32 %v769, %v771
        %v773 = vadd.f32 %v769, %v772
        %vm774 = vweird.f32 %v768
        %vm775 = vweird.f32 %v769
        %vm776 = vmor %vm774, %vm775
        %v777 = vsel %vm776, %v769, %v773
        %v778 = vand.u32 2147483647, %v768
        %vm779 = vcmp.eq.f32.partialorder %v778, 8.507059e+37
        %v780 = vand.u32 %v768, 2147483648
        %v781 = vor.u32 1.1754944e-38, %v780
        %v782 = vsel %vm779, %v781, %v777
        %v783 = vmul.f32 1.0, %v782
        %v784 = vtanh.pop %v764
        %v785 = vmul.f32 %v783, %v724
        %787 = vrot.lane.b32.xlu0 %v784, 64
        %v788 = vpop.permute.xlu0 %787
        %v790 = vmul.f32 %v783, %v788
        %792 = vrot.lane.b32.xlu0 %v790, 32
        %v793 = vpop.permute.xlu0 %792
        %v795 = vadd.f32 %v785, %v793
        %v796 = vtanh.pop %v795
        %798 = vrot.lane.b32.xlu0 %v796, 64
        %v799 = vpop.permute.xlu0 %798
        %v801 = vmul.f32 %v783, %v799
        %803 = vrot.lane.b32.xlu0 %v801, 32
        %v804 = vpop.permute.xlu0 %803
        %s806 = scalar_lea.vmem %s286, %s739
        %807 = vst.msk [vmem:[%s806] sm:$0x3] %vm379, %v804
        %s808 = smul.u32 %s382, 7
        %s809 = sadd.s32 %s808, %s304
        %s810 = smul.u32 %s809, 2
        %s811 = scalar_lea.vmem %s235, %s810 [#allocation4]
        %v812 = vld [vmem:[%s811] sm:$0x3]
        %v813 = vsel %vm308, %v804, 0
        %815 = vmatpush.msra.mxu0 0.0
        %816 = vmatpush.msra.mxu0 0.0
        %817 = vmatpush.msra.mxu0 0.0
        %818 = vmatpush.msra.mxu0 0.0
        %819 = vmatpush.msra.mxu0 0.0
        %820 = vmatpush.msra.mxu0 0.0
        %821 = vmatpush.msra.mxu0 0.0
        %822 = vmatpush.msra.mxu0 0.0
        %823 = vmatpush.msra.mxu0 0.0
        %824 = vmatpush.msra.mxu0 0.0
        %825 = vmatpush.msra.mxu0 0.0
        %826 = vmatpush.msra.mxu0 0.0
        %827 = vmatpush.msra.mxu0 %v301
        %828 = vmatpush.msra.mxu0 %v300
        %829 = vmatpush.msra.mxu0 %v299
        %830 = vmatpush.msra.mxu0 %v298
        %831 = vmatmul.f32.gmra.mxu0 %v813
        %v832 = vpop.f32.mrf.mxu0
        %v833 = vadd.f32 0.0, %v832
        %834 = vdwg.mxu0
        %v835 = vadd.f32 %v812, %v833
        %v836 = vxor.u32 %v835, 2147483648
        %v837 = vmul.f32 %v836, 1.442695
        %v838 = vpow.pop %v837
        %v839 = vadd.f32 %v838, 1.0
        %v840 = vrcp.pop %v839
        %v841 = vmul.f32 %v839, %v840
        %v842 = vsub.f32 1.0, %v841
        %v843 = vmul.f32 %v840, %v842
        %v844 = vadd.f32 %v840, %v843
        %vm845 = vweird.f32 %v839
        %vm846 = vweird.f32 %v840
        %vm847 = vmor %vm845, %vm846
        %v848 = vsel %vm847, %v840, %v844
        %v849 = vand.u32 2147483647, %v839
        %vm850 = vcmp.eq.f32.partialorder %v849, 8.507059e+37
        %v851 = vand.u32 %v839, 2147483648
        %v852 = vor.u32 1.1754944e-38, %v851
        %v853 = vsel %vm850, %v852, %v848
        %v854 = vmul.f32 1.0, %v853
        %v855 = vtanh.pop %v835
        %v856 = vmul.f32 %v854, %v795
        %858 = vrot.lane.b32.xlu0 %v855, 64
        %v859 = vpop.permute.xlu0 %858
        %v861 = vmul.f32 %v854, %v859
        %863 = vrot.lane.b32.xlu0 %v861, 32
        %v864 = vpop.permute.xlu0 %863
        %v866 = vadd.f32 %v856, %v864
        %v867 = vtanh.pop %v866
        %869 = vrot.lane.b32.xlu0 %v867, 64
        %v870 = vpop.permute.xlu0 %869
        %v872 = vmul.f32 %v854, %v870
        %874 = vrot.lane.b32.xlu0 %v872, 32
        %v875 = vpop.permute.xlu0 %874
        %s877 = scalar_lea.vmem %s286, %s810
        %878 = vst.msk [vmem:[%s877] sm:$0x3] %vm379, %v875
        %879 = vst.msk [vmem:[#allocation2] sm:$0x3] %vm379, %v875
        %881 = vrot.lane.b32.xlu0 %v866, 96
        %v882 = vpop.permute.xlu0 %881
        %884 = vst.msk [vmem:[#allocation3] sm:$0x3] %vm379, %v882
        %s885 = smul.u32 %s17, 2
        %s886 = ssub.s32 1, %s885
        %s887 = smul.u32 %s18, %s886
        %s888 = smul.u32 8, %s887
        %p889 = scmp.lt.s32.totalorder %s17, 1
        %s890 = scalar_select %p889, %s17, 1
        %p891 = scmp.lt.s32.totalorder %s888, 7
        %s892 = scalar_select %p891, %s888, 7
        %s893 = smul.addr %s890, 8
        %s894 = sadd.s32 %s892, %s893
        %s895 = smul.addr %s894, 2
        %s896 = scalar_lea.vmem %s2, %s895
        // Predicated region
        $region74: #{bidirectional_lstm.4} parent=64 // pred_check
          %p897 = pneg %p111
        $region75: #{bidirectional_lstm.4} parent=64 // pred_check_branch
          %899 = sbr.rel (%p897) target = $region77
        $region76: #{bidirectional_lstm.4} parent=64 // pred_region
          %s900 = smul.u32 %s17, 2
          %s901 = ssub.s32 1, %s900
          %s902 = smul.u32 %s18, %s901
          %s903 = smul.u32 8, %s902
        $region77: #{bidirectional_lstm.4} parent=64 // pred_fallthru
          _
      $region65: #{bidirectional_lstm.4} parent=5 // pred_fallthru
        _
      %p904 = scmp.le.s32.totalorder 2, %s8
      // Predicated region
      $region78: #{bidirectional_lstm.4} parent=5 // pred_check
        %p905 = pneg %p904
      $region79: #{bidirectional_lstm.4} parent=5 // pred_check_branch
        %907 = sbr.rel (%p905) target = $region81
      $region80: #{bidirectional_lstm.4} parent=5 // pred_region
        %s908 = ssub.s32 %s8, 2
        // Predicated region
        $region82: #{bidirectional_lstm.4} parent=80 // pred_check
          %p909 = pneg %p117
        $region83: #{bidirectional_lstm.4} parent=80 // pred_check_branch
          %911 = sbr.rel (%p909) target = $region85
        $region84: #{bidirectional_lstm.4} parent=80 // pred_region
          %s912 = smul.u32 %s19, 2
          %s913 = ssub.s32 1, %s912
          %s914 = smul.u32 %s20, %s913
          %s915 = smul.u32 8, %s914
          %p916 = scmp.lt.s32.totalorder %s19, 1
          %s917 = scalar_select %p916, %s19, 1
          %p918 = scmp.lt.s32.totalorder %s915, 7
          %s919 = scalar_select %p918, %s915, 7
          %s920 = smul.addr %s917, 8
          %s921 = sadd.s32 %s919, %s920
          %s922 = smul.addr %s921, 2
          %s923 = scalar_lea.vmem %s2, %s922
        $region85: #{bidirectional_lstm.4} parent=80 // pred_fallthru
          _
      $region81: #{bidirectional_lstm.4} parent=5 // pred_fallthru
        _
    $region6: #{bidirectional_lstm.4} parent=1 // loop_footer
      %s12 = sadd.s32 1, %s8
    $region7: #{bidirectional_lstm.4} parent=1 // loop_footer_branch
      %7 = sbr.rel target = $region3
    $region8: #{bidirectional_lstm.4} parent=1 // loop_exit
      _

</llo_original>
